<compile_context>
chip_gen: v5e
topology: v5e:2x2
jax: 0.10.0
libtpu: 0.0.40
codegen_flags: <defaults>
</compile_context>

<pallas_src>
import jax
import jax.numpy as jnp
from jax.experimental import pallas as pl
from jax.experimental.pallas import tpu as pltpu


def _lstm_tagger_kernel(x_ref, wih_ref, whh_ref, b_ref, wout_ref, bout_ref,
                        out_ref):
    """One grid step: BP pairs x P paths -> LSTM recurrence + max-pool + head.

    x_ref    : (T, P, BP, D)  embedded paths, time-major, path-major rows
    wih_ref  : (D, 4H)        input->gates weights (transposed; gate order i,f,g,o)
    whh_ref  : (H, 4H)        hidden->gates weights (transposed)
    b_ref    : (1, 4H)        combined bias (b_ih + b_hh)
    wout_ref : (H, O)         output linear weight (transposed)
    bout_ref : (1, O)         output linear bias
    out_ref  : (BP, O)        sigmoid(linear(max_over_paths(h_final)))
    """
    T, P, BP, D = x_ref.shape
    H = whh_ref.shape[0]
    R = P * BP                                    # LSTM rows per block

    whh = whh_ref[...]                            # (H, 4H), loaded once

    # Hoisted input projection: one matmul covering every (time, path, pair)
    # row, with the bias added once (no per-step bias re-broadcast).
    # Row ordering after the reshape: row = (t*P + p)*BP + pair.
    x_flat = x_ref[...].reshape(T * R, D)
    xw = jnp.dot(x_flat, wih_ref[...],
                 preferred_element_type=jnp.float32) + b_ref[...]    # (T*R, 4H)

    h = jnp.zeros((R, H), jnp.float32)
    c = jnp.zeros((R, H), jnp.float32)

    # Fully unrolled recurrence: only h @ W_hh + activations stay on the
    # serial critical path; xw[t] slices are static, aligned sublane slices.
    for t in range(T):
        gates = xw[t * R:(t + 1) * R] + jnp.dot(
            h, whh, preferred_element_type=jnp.float32)               # (R, 4H)
        sig = jax.nn.sigmoid(gates)        # whole-vreg EUP pass
        tah = jnp.tanh(gates)              # whole-vreg EUP pass
        i_g = sig[:, 0:H]
        f_g = sig[:, H:2 * H]
        g_g = tah[:, 2 * H:3 * H]
        o_g = sig[:, 3 * H:4 * H]
        c = f_g * c + i_g * g_g
        h = o_g * jnp.tanh(c)

    # MaxPool2d((num_paths, 1)): rows are path-major, so the max over paths is
    # an elementwise maximum over P contiguous (BP, H) sublane groups.
    h_max = h[0:BP]
    for p in range(1, P):
        h_max = jnp.maximum(h_max, h[p * BP:(p + 1) * BP])            # (BP, H)

    logits = jnp.dot(h_max, wout_ref[...],
                     preferred_element_type=jnp.float32) + bout_ref[...]
    out_ref[...] = jax.nn.sigmoid(logits)                             # (BP, O)


def lstm_tagger_forward(paths_ids, params, *, pairs_per_block=8):
    """Batched LSTMTagger forward.

    paths_ids: int32 (num_pairs, num_paths, seq_len); each pair corresponds to
               one independent LSTMTagger.forward(paths_between_one_pair_id).
    Returns (num_pairs, 1, 1, out_dim) float32 (PyTorch output shape per pair).
    """
    emb = params["embedding"]          # (node_size, D)
    wih_t = params["wih_t"]            # (D, 4H)
    whh_t = params["whh_t"]            # (H, 4H)
    b = params["b"]                    # (1, 4H)
    wout_t = params["wout_t"]          # (H, O)
    bout = params["bout"]              # (1, O)

    num_pairs, P, T = paths_ids.shape
    D = emb.shape[1]
    H = whh_t.shape[0]
    O = wout_t.shape[1]
    BP = pairs_per_block
    assert num_pairs % BP == 0, "num_pairs must be a multiple of pairs_per_block"

    # Embedding lookup (glue: plain JAX gather), then lay out as
    # (time, path, pair, D) so each pair-block is one rectangular tile and the
    # in-kernel max over paths reduces over contiguous sublane groups.
    x = jnp.take(emb, paths_ids, axis=0).astype(jnp.float32)   # (NP, P, T, D)
    x = jnp.transpose(x, (2, 1, 0, 3))                         # (T, P, NP, D)

    grid = (num_pairs // BP,)
    out = pl.pallas_call(
        _lstm_tagger_kernel,
        out_shape=jax.ShapeDtypeStruct((num_pairs, O), jnp.float32),
        grid=grid,
        in_specs=[
            pl.BlockSpec((T, P, BP, D), lambda i: (0, 0, i, 0)),
            pl.BlockSpec((D, 4 * H), lambda i: (0, 0)),
            pl.BlockSpec((H, 4 * H), lambda i: (0, 0)),
            pl.BlockSpec((1, 4 * H), lambda i: (0, 0)),
            pl.BlockSpec((H, O), lambda i: (0, 0)),
            pl.BlockSpec((1, O), lambda i: (0, 0)),
        ],
        out_specs=pl.BlockSpec((BP, O), lambda i: (i, 0)),
        compiler_params=pltpu.CompilerParams(
            dimension_semantics=("parallel",)),
    )(x, wih_t, whh_t, b, wout_t, bout)

    # Match the PyTorch per-pair output shape (1, 1, out_dim).
    return out.reshape(num_pairs, 1, 1, O)


def _reference_forward(paths_ids, params):
    """Pure-JAX reference of the same batched forward pass (for validation)."""
    emb = params["embedding"]
    H = params["whh_t"].shape[0]
    x = jnp.take(emb, paths_ids, axis=0).astype(jnp.float32)   # (NP, P, T, D)

    def per_path(xp):                                          # xp: (T, D)
        def step(carry, xt):
            h, c = carry
            gates = xt @ params["wih_t"] + h @ params["whh_t"] + params["b"][0]
            i_g = jax.nn.sigmoid(gates[0:H])
            f_g = jax.nn.sigmoid(gates[H:2 * H])
            g_g = jnp.tanh(gates[2 * H:3 * H])
            o_g = jax.nn.sigmoid(gates[3 * H:4 * H])
            c_new = f_g * c + i_g * g_g
            h_new = o_g * jnp.tanh(c_new)
            return (h_new, c_new), None
        (h_f, _), _ = jax.lax.scan(step, (jnp.zeros(H), jnp.zeros(H)), xp)
        return h_f

    h_all = jax.vmap(jax.vmap(per_path))(x)                    # (NP, P, H)
    h_max = jnp.max(h_all, axis=1)                             # (NP, H)
    out = jax.nn.sigmoid(h_max @ params["wout_t"] + params["bout"])  # (NP, O)
    return out.reshape(x.shape[0], 1, 1, -1)


if __name__ == "__main__":
    # Small, deterministic setup.
    node_size = 20
    input_dim = 16
    hidden_dim = 32
    out_dim = 8
    num_paths = 4
    seq_len = 8
    num_pairs = 16          # independent (source, target) pairs batched per call

    key = jax.random.PRNGKey(0)
    k_emb, k_wih, k_whh, k_bih, k_bhh, k_wo, k_bo, k_ids = jax.random.split(key, 8)

    # Deterministic parameter init (gate order i, f, g, o as in PyTorch).
    scale = 0.1
    embedding = jax.random.normal(k_emb, (node_size, input_dim), jnp.float32)
    w_ih = scale * jax.random.normal(k_wih, (4 * hidden_dim, input_dim), jnp.float32)
    w_hh = scale * jax.random.normal(k_whh, (4 * hidden_dim, hidden_dim), jnp.float32)
    b_ih = scale * jax.random.normal(k_bih, (4 * hidden_dim,), jnp.float32)
    b_hh = scale * jax.random.normal(k_bhh, (4 * hidden_dim,), jnp.float32)
    w_out = scale * jax.random.normal(k_wo, (out_dim, hidden_dim), jnp.float32)
    b_out = scale * jax.random.normal(k_bo, (out_dim,), jnp.float32)

    params = {
        "embedding": embedding,
        "wih_t": w_ih.T,                                # (D, 4H)
        "whh_t": w_hh.T,                                # (H, 4H)
        "b": (b_ih + b_hh).reshape(1, 4 * hidden_dim),  # (1, 4H)
        "wout_t": w_out.T,                              # (H, O)
        "bout": b_out.reshape(1, out_dim),              # (1, O)
    }

    # num_pairs path-sets, each with num_paths equal-length paths.
    paths_ids = jax.random.randint(
        k_ids, (num_pairs, num_paths, seq_len), 0, node_size, dtype=jnp.int32)

    out = lstm_tagger_forward(paths_ids, params, pairs_per_block=8)
    out = jax.block_until_ready(out)

    ref = _reference_forward(paths_ids, params)
    assert out.shape == (num_pairs, 1, 1, out_dim)
    assert jnp.allclose(out, ref, rtol=1e-3, atol=1e-3), "mismatch vs reference"

    print("KERNEL_OK")
</pallas_src>

<mosaic_0001>
module attributes {stable_mosaic.version = 11 : i64} {
  func.func @_lstm_tagger_kernel(%arg0: i32, %arg1: memref<8x4x8x16xf32, #tpu.memory_space<vmem>>, %arg2: memref<16x128xf32, #tpu.memory_space<vmem>>, %arg3: memref<32x128xf32, #tpu.memory_space<vmem>>, %arg4: memref<1x128xf32, #tpu.memory_space<vmem>>, %arg5: memref<32x8xf32, #tpu.memory_space<vmem>>, %arg6: memref<1x8xf32, #tpu.memory_space<vmem>>, %arg7: memref<8x8xf32, #tpu.memory_space<vmem>>) attributes {dimension_semantics = [#tpu.dimension_semantics<parallel>], iteration_bounds = array<i64: 2>, scalar_prefetch = 0 : i64, scratch_operands = 0 : i64, tpu.core_type = #tpu.core_type<tc>, window_params = [{transform_indices = @transform_0, window_bounds = array<i64: 8, 4, 8, 16>}, {pipeline_mode = #tpu.pipeline_mode<synchronous>, transform_indices = @transform_1, window_bounds = array<i64: 16, 128>}, {pipeline_mode = #tpu.pipeline_mode<synchronous>, transform_indices = @transform_2, window_bounds = array<i64: 32, 128>}, {pipeline_mode = #tpu.pipeline_mode<synchronous>, transform_indices = @transform_3, window_bounds = array<i64: 1, 128>}, {pipeline_mode = #tpu.pipeline_mode<synchronous>, transform_indices = @transform_4, window_bounds = array<i64: 32, 8>}, {pipeline_mode = #tpu.pipeline_mode<synchronous>, transform_indices = @transform_5, window_bounds = array<i64: 1, 8>}, {transform_indices = @transform_6, window_bounds = array<i64: 8, 8>}]} {
    %c0 = arith.constant 0 : index
    %c0_0 = arith.constant 0 : index
    %0 = vector.load %arg3[%c0, %c0_0] : memref<32x128xf32, #tpu.memory_space<vmem>>, vector<32x128xf32>
    %c0_1 = arith.constant 0 : index
    %c0_2 = arith.constant 0 : index
    %c0_3 = arith.constant 0 : index
    %c0_4 = arith.constant 0 : index
    %1 = vector.load %arg1[%c0_1, %c0_2, %c0_3, %c0_4] : memref<8x4x8x16xf32, #tpu.memory_space<vmem>>, vector<8x4x8x16xf32>
    %2 = vector.shape_cast %1 : vector<8x4x8x16xf32> to vector<256x16xf32>
    %c0_5 = arith.constant 0 : index
    %c0_6 = arith.constant 0 : index
    %3 = vector.load %arg2[%c0_5, %c0_6] : memref<16x128xf32, #tpu.memory_space<vmem>>, vector<16x128xf32>
    %cst = arith.constant dense<0.000000e+00> : vector<256x128xf32>
    %4 = tpu.matmul %2, %3, %cst {dimension_numbers = #tpu.dot_dimension_numbers<[1], [0], [0], [1], [0, 0, 1, 1], [], []>} : vector<256x16xf32>, vector<16x128xf32>, vector<256x128xf32> -> vector<256x128xf32>
    %c0_7 = arith.constant 0 : index
    %c0_8 = arith.constant 0 : index
    %5 = vector.load %arg4[%c0_7, %c0_8] : memref<1x128xf32, #tpu.memory_space<vmem>>, vector<1x128xf32>
    %6 = vector.broadcast %5 : vector<1x128xf32> to vector<256x128xf32>
    %7 = arith.addf %4, %6 : vector<256x128xf32>
    %cst_9 = arith.constant 0.000000e+00 : f32
    %8 = vector.broadcast %cst_9 : f32 to vector<32x32xf32>
    %cst_10 = arith.constant 0.000000e+00 : f32
    %9 = vector.broadcast %cst_10 : f32 to vector<32x32xf32>
    %10 = vector.extract_strided_slice %7 {offsets = [0, 0], sizes = [32, 128], strides = [1, 1]} : vector<256x128xf32> to vector<32x128xf32>
    %cst_11 = arith.constant dense<0.000000e+00> : vector<32x128xf32>
    %11 = tpu.matmul %8, %0, %cst_11 {dimension_numbers = #tpu.dot_dimension_numbers<[1], [0], [0], [1], [0, 0, 1, 1], [], []>} : vector<32x32xf32>, vector<32x128xf32>, vector<32x128xf32> -> vector<32x128xf32>
    %12 = arith.addf %10, %11 : vector<32x128xf32>
    %13 = arith.negf %12 : vector<32x128xf32>
    %14 = math.exp %13 : vector<32x128xf32>
    %cst_12 = arith.constant 1.000000e+00 : f32
    %15 = vector.broadcast %cst_12 : f32 to vector<32x128xf32>
    %16 = arith.addf %15, %14 : vector<32x128xf32>
    %17 = arith.divf %15, %16 : vector<32x128xf32>
    %18 = math.tanh %12 : vector<32x128xf32>
    %19 = vector.extract_strided_slice %17 {offsets = [0, 0], sizes = [32, 32], strides = [1, 1]} : vector<32x128xf32> to vector<32x32xf32>
    %20 = vector.extract_strided_slice %17 {offsets = [0, 32], sizes = [32, 32], strides = [1, 1]} : vector<32x128xf32> to vector<32x32xf32>
    %21 = vector.extract_strided_slice %18 {offsets = [0, 64], sizes = [32, 32], strides = [1, 1]} : vector<32x128xf32> to vector<32x32xf32>
    %22 = vector.extract_strided_slice %17 {offsets = [0, 96], sizes = [32, 32], strides = [1, 1]} : vector<32x128xf32> to vector<32x32xf32>
    %23 = arith.mulf %20, %9 : vector<32x32xf32>
    %24 = arith.mulf %19, %21 : vector<32x32xf32>
    %25 = arith.addf %23, %24 : vector<32x32xf32>
    %26 = math.tanh %25 : vector<32x32xf32>
    %27 = arith.mulf %22, %26 : vector<32x32xf32>
    %28 = vector.extract_strided_slice %7 {offsets = [32, 0], sizes = [32, 128], strides = [1, 1]} : vector<256x128xf32> to vector<32x128xf32>
    %cst_13 = arith.constant dense<0.000000e+00> : vector<32x128xf32>
    %29 = tpu.matmul %27, %0, %cst_13 {dimension_numbers = #tpu.dot_dimension_numbers<[1], [0], [0], [1], [0, 0, 1, 1], [], []>} : vector<32x32xf32>, vector<32x128xf32>, vector<32x128xf32> -> vector<32x128xf32>
    %30 = arith.addf %28, %29 : vector<32x128xf32>
    %31 = arith.negf %30 : vector<32x128xf32>
    %32 = math.exp %31 : vector<32x128xf32>
    %cst_14 = arith.constant 1.000000e+00 : f32
    %33 = vector.broadcast %cst_14 : f32 to vector<32x128xf32>
    %34 = arith.addf %33, %32 : vector<32x128xf32>
    %35 = arith.divf %33, %34 : vector<32x128xf32>
    %36 = math.tanh %30 : vector<32x128xf32>
    %37 = vector.extract_strided_slice %35 {offsets = [0, 0], sizes = [32, 32], strides = [1, 1]} : vector<32x128xf32> to vector<32x32xf32>
    %38 = vector.extract_strided_slice %35 {offsets = [0, 32], sizes = [32, 32], strides = [1, 1]} : vector<32x128xf32> to vector<32x32xf32>
    %39 = vector.extract_strided_slice %36 {offsets = [0, 64], sizes = [32, 32], strides = [1, 1]} : vector<32x128xf32> to vector<32x32xf32>
    %40 = vector.extract_strided_slice %35 {offsets = [0, 96], sizes = [32, 32], strides = [1, 1]} : vector<32x128xf32> to vector<32x32xf32>
    %41 = arith.mulf %38, %25 : vector<32x32xf32>
    %42 = arith.mulf %37, %39 : vector<32x32xf32>
    %43 = arith.addf %41, %42 : vector<32x32xf32>
    %44 = math.tanh %43 : vector<32x32xf32>
    %45 = arith.mulf %40, %44 : vector<32x32xf32>
    %46 = vector.extract_strided_slice %7 {offsets = [64, 0], sizes = [32, 128], strides = [1, 1]} : vector<256x128xf32> to vector<32x128xf32>
    %cst_15 = arith.constant dense<0.000000e+00> : vector<32x128xf32>
    %47 = tpu.matmul %45, %0, %cst_15 {dimension_numbers = #tpu.dot_dimension_numbers<[1], [0], [0], [1], [0, 0, 1, 1], [], []>} : vector<32x32xf32>, vector<32x128xf32>, vector<32x128xf32> -> vector<32x128xf32>
    %48 = arith.addf %46, %47 : vector<32x128xf32>
    %49 = arith.negf %48 : vector<32x128xf32>
    %50 = math.exp %49 : vector<32x128xf32>
    %cst_16 = arith.constant 1.000000e+00 : f32
    %51 = vector.broadcast %cst_16 : f32 to vector<32x128xf32>
    %52 = arith.addf %51, %50 : vector<32x128xf32>
    %53 = arith.divf %51, %52 : vector<32x128xf32>
    %54 = math.tanh %48 : vector<32x128xf32>
    %55 = vector.extract_strided_slice %53 {offsets = [0, 0], sizes = [32, 32], strides = [1, 1]} : vector<32x128xf32> to vector<32x32xf32>
    %56 = vector.extract_strided_slice %53 {offsets = [0, 32], sizes = [32, 32], strides = [1, 1]} : vector<32x128xf32> to vector<32x32xf32>
    %57 = vector.extract_strided_slice %54 {offsets = [0, 64], sizes = [32, 32], strides = [1, 1]} : vector<32x128xf32> to vector<32x32xf32>
    %58 = vector.extract_strided_slice %53 {offsets = [0, 96], sizes = [32, 32], strides = [1, 1]} : vector<32x128xf32> to vector<32x32xf32>
    %59 = arith.mulf %56, %43 : vector<32x32xf32>
    %60 = arith.mulf %55, %57 : vector<32x32xf32>
    %61 = arith.addf %59, %60 : vector<32x32xf32>
    %62 = math.tanh %61 : vector<32x32xf32>
    %63 = arith.mulf %58, %62 : vector<32x32xf32>
    %64 = vector.extract_strided_slice %7 {offsets = [96, 0], sizes = [32, 128], strides = [1, 1]} : vector<256x128xf32> to vector<32x128xf32>
    %cst_17 = arith.constant dense<0.000000e+00> : vector<32x128xf32>
    %65 = tpu.matmul %63, %0, %cst_17 {dimension_numbers = #tpu.dot_dimension_numbers<[1], [0], [0], [1], [0, 0, 1, 1], [], []>} : vector<32x32xf32>, vector<32x128xf32>, vector<32x128xf32> -> vector<32x128xf32>
    %66 = arith.addf %64, %65 : vector<32x128xf32>
    %67 = arith.negf %66 : vector<32x128xf32>
    %68 = math.exp %67 : vector<32x128xf32>
    %cst_18 = arith.constant 1.000000e+00 : f32
    %69 = vector.broadcast %cst_18 : f32 to vector<32x128xf32>
    %70 = arith.addf %69, %68 : vector<32x128xf32>
    %71 = arith.divf %69, %70 : vector<32x128xf32>
    %72 = math.tanh %66 : vector<32x128xf32>
    %73 = vector.extract_strided_slice %71 {offsets = [0, 0], sizes = [32, 32], strides = [1, 1]} : vector<32x128xf32> to vector<32x32xf32>
    %74 = vector.extract_strided_slice %71 {offsets = [0, 32], sizes = [32, 32], strides = [1, 1]} : vector<32x128xf32> to vector<32x32xf32>
    %75 = vector.extract_strided_slice %72 {offsets = [0, 64], sizes = [32, 32], strides = [1, 1]} : vector<32x128xf32> to vector<32x32xf32>
    %76 = vector.extract_strided_slice %71 {offsets = [0, 96], sizes = [32, 32], strides = [1, 1]} : vector<32x128xf32> to vector<32x32xf32>
    %77 = arith.mulf %74, %61 : vector<32x32xf32>
    %78 = arith.mulf %73, %75 : vector<32x32xf32>
    %79 = arith.addf %77, %78 : vector<32x32xf32>
    %80 = math.tanh %79 : vector<32x32xf32>
    %81 = arith.mulf %76, %80 : vector<32x32xf32>
    %82 = vector.extract_strided_slice %7 {offsets = [128, 0], sizes = [32, 128], strides = [1, 1]} : vector<256x128xf32> to vector<32x128xf32>
    %cst_19 = arith.constant dense<0.000000e+00> : vector<32x128xf32>
    %83 = tpu.matmul %81, %0, %cst_19 {dimension_numbers = #tpu.dot_dimension_numbers<[1], [0], [0], [1], [0, 0, 1, 1], [], []>} : vector<32x32xf32>, vector<32x128xf32>, vector<32x128xf32> -> vector<32x128xf32>
    %84 = arith.addf %82, %83 : vector<32x128xf32>
    %85 = arith.negf %84 : vector<32x128xf32>
    %86 = math.exp %85 : vector<32x128xf32>
    %cst_20 = arith.constant 1.000000e+00 : f32
    %87 = vector.broadcast %cst_20 : f32 to vector<32x128xf32>
    %88 = arith.addf %87, %86 : vector<32x128xf32>
    %89 = arith.divf %87, %88 : vector<32x128xf32>
    %90 = math.tanh %84 : vector<32x128xf32>
    %91 = vector.extract_strided_slice %89 {offsets = [0, 0], sizes = [32, 32], strides = [1, 1]} : vector<32x128xf32> to vector<32x32xf32>
    %92 = vector.extract_strided_slice %89 {offsets = [0, 32], sizes = [32, 32], strides = [1, 1]} : vector<32x128xf32> to vector<32x32xf32>
    %93 = vector.extract_strided_slice %90 {offsets = [0, 64], sizes = [32, 32], strides = [1, 1]} : vector<32x128xf32> to vector<32x32xf32>
    %94 = vector.extract_strided_slice %89 {offsets = [0, 96], sizes = [32, 32], strides = [1, 1]} : vector<32x128xf32> to vector<32x32xf32>
    %95 = arith.mulf %92, %79 : vector<32x32xf32>
    %96 = arith.mulf %91, %93 : vector<32x32xf32>
    %97 = arith.addf %95, %96 : vector<32x32xf32>
    %98 = math.tanh %97 : vector<32x32xf32>
    %99 = arith.mulf %94, %98 : vector<32x32xf32>
    %100 = vector.extract_strided_slice %7 {offsets = [160, 0], sizes = [32, 128], strides = [1, 1]} : vector<256x128xf32> to vector<32x128xf32>
    %cst_21 = arith.constant dense<0.000000e+00> : vector<32x128xf32>
    %101 = tpu.matmul %99, %0, %cst_21 {dimension_numbers = #tpu.dot_dimension_numbers<[1], [0], [0], [1], [0, 0, 1, 1], [], []>} : vector<32x32xf32>, vector<32x128xf32>, vector<32x128xf32> -> vector<32x128xf32>
    %102 = arith.addf %100, %101 : vector<32x128xf32>
    %103 = arith.negf %102 : vector<32x128xf32>
    %104 = math.exp %103 : vector<32x128xf32>
    %cst_22 = arith.constant 1.000000e+00 : f32
    %105 = vector.broadcast %cst_22 : f32 to vector<32x128xf32>
    %106 = arith.addf %105, %104 : vector<32x128xf32>
    %107 = arith.divf %105, %106 : vector<32x128xf32>
    %108 = math.tanh %102 : vector<32x128xf32>
    %109 = vector.extract_strided_slice %107 {offsets = [0, 0], sizes = [32, 32], strides = [1, 1]} : vector<32x128xf32> to vector<32x32xf32>
    %110 = vector.extract_strided_slice %107 {offsets = [0, 32], sizes = [32, 32], strides = [1, 1]} : vector<32x128xf32> to vector<32x32xf32>
    %111 = vector.extract_strided_slice %108 {offsets = [0, 64], sizes = [32, 32], strides = [1, 1]} : vector<32x128xf32> to vector<32x32xf32>
    %112 = vector.extract_strided_slice %107 {offsets = [0, 96], sizes = [32, 32], strides = [1, 1]} : vector<32x128xf32> to vector<32x32xf32>
    %113 = arith.mulf %110, %97 : vector<32x32xf32>
    %114 = arith.mulf %109, %111 : vector<32x32xf32>
    %115 = arith.addf %113, %114 : vector<32x32xf32>
    %116 = math.tanh %115 : vector<32x32xf32>
    %117 = arith.mulf %112, %116 : vector<32x32xf32>
    %118 = vector.extract_strided_slice %7 {offsets = [192, 0], sizes = [32, 128], strides = [1, 1]} : vector<256x128xf32> to vector<32x128xf32>
    %cst_23 = arith.constant dense<0.000000e+00> : vector<32x128xf32>
    %119 = tpu.matmul %117, %0, %cst_23 {dimension_numbers = #tpu.dot_dimension_numbers<[1], [0], [0], [1], [0, 0, 1, 1], [], []>} : vector<32x32xf32>, vector<32x128xf32>, vector<32x128xf32> -> vector<32x128xf32>
    %120 = arith.addf %118, %119 : vector<32x128xf32>
    %121 = arith.negf %120 : vector<32x128xf32>
    %122 = math.exp %121 : vector<32x128xf32>
    %cst_24 = arith.constant 1.000000e+00 : f32
    %123 = vector.broadcast %cst_24 : f32 to vector<32x128xf32>
    %124 = arith.addf %123, %122 : vector<32x128xf32>
    %125 = arith.divf %123, %124 : vector<32x128xf32>
    %126 = math.tanh %120 : vector<32x128xf32>
    %127 = vector.extract_strided_slice %125 {offsets = [0, 0], sizes = [32, 32], strides = [1, 1]} : vector<32x128xf32> to vector<32x32xf32>
    %128 = vector.extract_strided_slice %125 {offsets = [0, 32], sizes = [32, 32], strides = [1, 1]} : vector<32x128xf32> to vector<32x32xf32>
    %129 = vector.extract_strided_slice %126 {offsets = [0, 64], sizes = [32, 32], strides = [1, 1]} : vector<32x128xf32> to vector<32x32xf32>
    %130 = vector.extract_strided_slice %125 {offsets = [0, 96], sizes = [32, 32], strides = [1, 1]} : vector<32x128xf32> to vector<32x32xf32>
    %131 = arith.mulf %128, %115 : vector<32x32xf32>
    %132 = arith.mulf %127, %129 : vector<32x32xf32>
    %133 = arith.addf %131, %132 : vector<32x32xf32>
    %134 = math.tanh %133 : vector<32x32xf32>
    %135 = arith.mulf %130, %134 : vector<32x32xf32>
    %136 = vector.extract_strided_slice %7 {offsets = [224, 0], sizes = [32, 128], strides = [1, 1]} : vector<256x128xf32> to vector<32x128xf32>
    %cst_25 = arith.constant dense<0.000000e+00> : vector<32x128xf32>
    %137 = tpu.matmul %135, %0, %cst_25 {dimension_numbers = #tpu.dot_dimension_numbers<[1], [0], [0], [1], [0, 0, 1, 1], [], []>} : vector<32x32xf32>, vector<32x128xf32>, vector<32x128xf32> -> vector<32x128xf32>
    %138 = arith.addf %136, %137 : vector<32x128xf32>
    %139 = arith.negf %138 : vector<32x128xf32>
    %140 = math.exp %139 : vector<32x128xf32>
    %cst_26 = arith.constant 1.000000e+00 : f32
    %141 = vector.broadcast %cst_26 : f32 to vector<32x128xf32>
    %142 = arith.addf %141, %140 : vector<32x128xf32>
    %143 = arith.divf %141, %142 : vector<32x128xf32>
    %144 = math.tanh %138 : vector<32x128xf32>
    %145 = vector.extract_strided_slice %143 {offsets = [0, 0], sizes = [32, 32], strides = [1, 1]} : vector<32x128xf32> to vector<32x32xf32>
    %146 = vector.extract_strided_slice %143 {offsets = [0, 32], sizes = [32, 32], strides = [1, 1]} : vector<32x128xf32> to vector<32x32xf32>
    %147 = vector.extract_strided_slice %144 {offsets = [0, 64], sizes = [32, 32], strides = [1, 1]} : vector<32x128xf32> to vector<32x32xf32>
    %148 = vector.extract_strided_slice %143 {offsets = [0, 96], sizes = [32, 32], strides = [1, 1]} : vector<32x128xf32> to vector<32x32xf32>
    %149 = arith.mulf %146, %133 : vector<32x32xf32>
    %150 = arith.mulf %145, %147 : vector<32x32xf32>
    %151 = arith.addf %149, %150 : vector<32x32xf32>
    %152 = math.tanh %151 : vector<32x32xf32>
    %153 = arith.mulf %148, %152 : vector<32x32xf32>
    %154 = vector.extract_strided_slice %153 {offsets = [0, 0], sizes = [8, 32], strides = [1, 1]} : vector<32x32xf32> to vector<8x32xf32>
    %155 = vector.extract_strided_slice %153 {offsets = [8, 0], sizes = [8, 32], strides = [1, 1]} : vector<32x32xf32> to vector<8x32xf32>
    %156 = arith.maximumf %154, %155 : vector<8x32xf32>
    %157 = vector.extract_strided_slice %153 {offsets = [16, 0], sizes = [8, 32], strides = [1, 1]} : vector<32x32xf32> to vector<8x32xf32>
    %158 = arith.maximumf %156, %157 : vector<8x32xf32>
    %159 = vector.extract_strided_slice %153 {offsets = [24, 0], sizes = [8, 32], strides = [1, 1]} : vector<32x32xf32> to vector<8x32xf32>
    %160 = arith.maximumf %158, %159 : vector<8x32xf32>
    %c0_27 = arith.constant 0 : index
    %c0_28 = arith.constant 0 : index
    %161 = vector.load %arg5[%c0_27, %c0_28] : memref<32x8xf32, #tpu.memory_space<vmem>>, vector<32x8xf32>
    %cst_29 = arith.constant dense<0.000000e+00> : vector<8x8xf32>
    %162 = tpu.matmul %160, %161, %cst_29 {dimension_numbers = #tpu.dot_dimension_numbers<[1], [0], [0], [1], [0, 0, 1, 1], [], []>} : vector<8x32xf32>, vector<32x8xf32>, vector<8x8xf32> -> vector<8x8xf32>
    %c0_30 = arith.constant 0 : index
    %c0_31 = arith.constant 0 : index
    %163 = vector.load %arg6[%c0_30, %c0_31] : memref<1x8xf32, #tpu.memory_space<vmem>>, vector<1x8xf32>
    %164 = vector.broadcast %163 : vector<1x8xf32> to vector<8x8xf32>
    %165 = arith.addf %162, %164 : vector<8x8xf32>
    %166 = arith.negf %165 : vector<8x8xf32>
    %167 = math.exp %166 : vector<8x8xf32>
    %cst_32 = arith.constant 1.000000e+00 : f32
    %168 = vector.broadcast %cst_32 : f32 to vector<8x8xf32>
    %169 = arith.addf %168, %167 : vector<8x8xf32>
    %170 = arith.divf %168, %169 : vector<8x8xf32>
    %c0_33 = arith.constant 0 : index
    %c0_34 = arith.constant 0 : index
    %171 = vector.load %arg7[%c0_33, %c0_34] : memref<8x8xf32, #tpu.memory_space<vmem>>, vector<8x8xf32>
    tpu.vector_store %arg7[%c0_33, %c0_34], %170 {strides = array<i32>} : memref<8x8xf32, #tpu.memory_space<vmem>>, vector<8x8xf32>,
    return
  }
  func.func @transform_0(%arg0: i32) -> (i32, i32, i32, i32) {
    %c0_i32 = arith.constant 0 : i32
    %c0_i32_0 = arith.constant 0 : i32
    %c0_i32_1 = arith.constant 0 : i32
    %c0_i32_2 = arith.constant 0 : i32
    return %c0_i32, %c0_i32_0, %arg0, %c0_i32_1 : i32, i32, i32, i32
  }
  func.func @transform_1(%arg0: i32) -> (i32, i32) {
    %c0_i32 = arith.constant 0 : i32
    %c0_i32_0 = arith.constant 0 : i32
    %c0_i32_1 = arith.constant 0 : i32
    return %c0_i32, %c0_i32_0 : i32, i32
  }
  func.func @transform_2(%arg0: i32) -> (i32, i32) {
    %c0_i32 = arith.constant 0 : i32
    %c0_i32_0 = arith.constant 0 : i32
    %c0_i32_1 = arith.constant 0 : i32
    return %c0_i32, %c0_i32_0 : i32, i32
  }
  func.func @transform_3(%arg0: i32) -> (i32, i32) {
    %c0_i32 = arith.constant 0 : i32
    %c0_i32_0 = arith.constant 0 : i32
    %c0_i32_1 = arith.constant 0 : i32
    return %c0_i32, %c0_i32_0 : i32, i32
  }
  func.func @transform_4(%arg0: i32) -> (i32, i32) {
    %c0_i32 = arith.constant 0 : i32
    %c0_i32_0 = arith.constant 0 : i32
    %c0_i32_1 = arith.constant 0 : i32
    return %c0_i32, %c0_i32_0 : i32, i32
  }
  func.func @transform_5(%arg0: i32) -> (i32, i32) {
    %c0_i32 = arith.constant 0 : i32
    %c0_i32_0 = arith.constant 0 : i32
    %c0_i32_1 = arith.constant 0 : i32
    return %c0_i32, %c0_i32_0 : i32, i32
  }
  func.func @transform_6(%arg0: i32) -> (i32, i32) {
    %c0_i32 = arith.constant 0 : i32
    %c0_i32_0 = arith.constant 0 : i32
    return %arg0, %c0_i32 : i32, i32
  }
}

</mosaic_0001>

<llo_original>
// kernel: tpu_custom_call.1
$region0: #{tpu_custom_call.1}
  #allocation0 [shape = 'u32[]', space=smem, size = 0x4, offset = 0x4, fixed_abs, tag = 'smem constant byte address 0x4 - core index']
  #allocation1 [shape = 'u32[72,128]{1,0:T(1,128)}', space=vmem, size = 0x9000, scoped, tag = 'internal scratch']
  %s0 = inlined_call_operand.hbm [shape: f32[8,4,16,16], index: 0, kind: input, shape index: {}]
  %s1 = inlined_call_operand.hbm [shape: f32[16,128], index: 1, kind: input, shape index: {}]
  %s2 = inlined_call_operand.vmem [shape: f32[32,128], index: 2, kind: input, shape index: {}]
  %s3 = inlined_call_operand.vmem [shape: f32[1,128], index: 3, kind: input, shape index: {}]
  %s4 = inlined_call_operand.vmem [shape: f32[32,8], index: 4, kind: input, shape index: {}]
  %s5 = inlined_call_operand.vmem [shape: f32[1,8], index: 5, kind: input, shape index: {}]
  %s6 = inlined_call_operand.vmem [shape: f32[16,8], index: 6, kind: output, shape index: {}]
  %s7 = sld [smem:[#allocation0]]
  $region65: #{tpu_custom_call.1} parent=0
    _
  %s9 = ssub.s32 1, %s7
  %s10 = scalar_select 0, %s9, %s7
  $region1: #{tpu_custom_call.1} parent=0
    #allocation2 [shape = 'u8[262144]{0}', space=vmem, size = 0x40000, scoped, tag = 'input window, operand 0']
    #allocation3 [shape = 's32[2]{0}', space=sflag, size = 0x8, scoped, tag = 'scoped memory for tpu_custom_call.1']
    #allocation4 [shape = 'u8[8192]{0}', space=vmem, size = 0x2000, scoped, tag = 'input window, operand 1, single buffered']
    #allocation5 [shape = 's32[1]{0}', space=sflag, size = 0x4, scoped, tag = 'scoped memory for tpu_custom_call.1']
    %11 = vsyncpa [#allocation3], 0
    %s12 = scalar_lea.sflag [#allocation3], 1
    %13 = vsyncpa %s12, 0
    %14 = vsyncpa [#allocation5], 0
    loop: start=0, step=1, limit=4
    $region2: #{tpu_custom_call.1} parent=1 // loop_pre_header
      _
    $region3: #{tpu_custom_call.1} parent=1 // loop_header
      %s16 = sphi 0, %s20
      %p17 = scmp.ge.s32.totalorder %s16, 4
      %s26 = sphi 0, %s28
      %s29 = sphi 0, %s26
      %s30 = sphi 0, %s29
      %s46 = sphi 0, %s30
      %s50 = sphi 0, %s50
      %s52 = sphi 0, %s50
      %s53 = sphi 0, %s52
      %s67 = sphi 0, %s53
      %s71 = sphi 0, %s71
      %s73 = sphi 0, %s71
      %s74 = sphi 0, %s73
      %s88 = sphi 0, %s74
      %s92 = sphi 0, %s92
      %s94 = sphi 0, %s92
      %s95 = sphi 0, %s94
      %s109 = sphi 0, %s95
      %s113 = sphi 0, %s113
      %s115 = sphi 0, %s113
      %s116 = sphi 0, %s115
      %s130 = sphi 0, %s116
      %s134 = sphi 0, %s134
      %s136 = sphi 0, %s134
      %s137 = sphi 0, %s136
      %s151 = sphi 0, %s137
      %s157 = sphi 0, %s159
      %s160 = sphi 0, %s157
      %s161 = sphi 0, %s160
      %s177 = sphi 0, %s161
    $region4: #{tpu_custom_call.1} parent=1 // loop_header_branch
      %19 = sbr.rel (%p17) target = $region8
    $region5: #{tpu_custom_call.1} parent=1 // loop_body
      %s21 = ssub.s32 %s16, 1
      %s22 = ssub.s32 %s16, 2
      %s23 = sadd.s32 %s16, 1
      %s24 = ssub.s32 %s16, %s23
      %p25 = scmp.eq.s32.totalorder %s24, 0
      %s27 = sadd.s32 %s26, 1
      %s28 = scalar_select %p25, %s26, %s27
      %p31 = pneg %p25
      %p32 = scmp.eq.s32.totalorder %s16, 1
      %p33 = por %p31, %p32
      %p34 = scmp.ne.s32.totalorder %s26, %s29
      %p35 = scmp.eq.s32.totalorder %s16, 0
      %p36 = por %p34, %p35
      %p37 = scmp.ne.s32.totalorder %s26, %s29
      %p38 = scmp.eq.s32.totalorder %s21, 1
      %p39 = por %p37, %p38
      %p40 = scmp.ne.s32.totalorder %s29, %s30
      %p41 = scmp.eq.s32.totalorder %s21, 0
      %p42 = por %p40, %p41
      %p43 = scmp.ne.s32.totalorder %s29, %s30
      %p44 = scmp.eq.s32.totalorder %s22, 1
      %p45 = por %p43, %p44
      %p47 = scmp.ne.s32.totalorder %s30, %s46
      %p48 = scmp.eq.s32.totalorder %s22, 0
      %p49 = por %p47, %p48
      %s51 = sadd.s32 %s50, 1
      %p54 = scmp.eq.s32.totalorder %s16, 1
      %p55 = scmp.ne.s32.totalorder %s50, %s52
      %p56 = scmp.eq.s32.totalorder %s16, 0
      %p57 = por %p55, %p56
      %p58 = scmp.ne.s32.totalorder %s50, %s52
      %p59 = scmp.eq.s32.totalorder %s21, 1
      %p60 = por %p58, %p59
      %p61 = scmp.ne.s32.totalorder %s52, %s53
      %p62 = scmp.eq.s32.totalorder %s21, 0
      %p63 = por %p61, %p62
      %p64 = scmp.ne.s32.totalorder %s52, %s53
      %p65 = scmp.eq.s32.totalorder %s22, 1
      %p66 = por %p64, %p65
      %p68 = scmp.ne.s32.totalorder %s53, %s67
      %p69 = scmp.eq.s32.totalorder %s22, 0
      %p70 = por %p68, %p69
      %s72 = sadd.s32 %s71, 1
      %p75 = scmp.eq.s32.totalorder %s16, 1
      %p76 = scmp.ne.s32.totalorder %s71, %s73
      %p77 = scmp.eq.s32.totalorder %s16, 0
      %p78 = por %p76, %p77
      %p79 = scmp.ne.s32.totalorder %s71, %s73
      %p80 = scmp.eq.s32.totalorder %s21, 1
      %p81 = por %p79, %p80
      %p82 = scmp.ne.s32.totalorder %s73, %s74
      %p83 = scmp.eq.s32.totalorder %s21, 0
      %p84 = por %p82, %p83
      %p85 = scmp.ne.s32.totalorder %s73, %s74
      %p86 = scmp.eq.s32.totalorder %s22, 1
      %p87 = por %p85, %p86
      %p89 = scmp.ne.s32.totalorder %s74, %s88
      %p90 = scmp.eq.s32.totalorder %s22, 0
      %p91 = por %p89, %p90
      %s93 = sadd.s32 %s92, 1
      %p96 = scmp.eq.s32.totalorder %s16, 1
      %p97 = scmp.ne.s32.totalorder %s92, %s94
      %p98 = scmp.eq.s32.totalorder %s16, 0
      %p99 = por %p97, %p98
      %p100 = scmp.ne.s32.totalorder %s92, %s94
      %p101 = scmp.eq.s32.totalorder %s21, 1
      %p102 = por %p100, %p101
      %p103 = scmp.ne.s32.totalorder %s94, %s95
      %p104 = scmp.eq.s32.totalorder %s21, 0
      %p105 = por %p103, %p104
      %p106 = scmp.ne.s32.totalorder %s94, %s95
      %p107 = scmp.eq.s32.totalorder %s22, 1
      %p108 = por %p106, %p107
      %p110 = scmp.ne.s32.totalorder %s95, %s109
      %p111 = scmp.eq.s32.totalorder %s22, 0
      %p112 = por %p110, %p111
      %s114 = sadd.s32 %s113, 1
      %p117 = scmp.eq.s32.totalorder %s16, 1
      %p118 = scmp.ne.s32.totalorder %s113, %s115
      %p119 = scmp.eq.s32.totalorder %s16, 0
      %p120 = por %p118, %p119
      %p121 = scmp.ne.s32.totalorder %s113, %s115
      %p122 = scmp.eq.s32.totalorder %s21, 1
      %p123 = por %p121, %p122
      %p124 = scmp.ne.s32.totalorder %s115, %s116
      %p125 = scmp.eq.s32.totalorder %s21, 0
      %p126 = por %p124, %p125
      %p127 = scmp.ne.s32.totalorder %s115, %s116
      %p128 = scmp.eq.s32.totalorder %s22, 1
      %p129 = por %p127, %p128
      %p131 = scmp.ne.s32.totalorder %s116, %s130
      %p132 = scmp.eq.s32.totalorder %s22, 0
      %p133 = por %p131, %p132
      %s135 = sadd.s32 %s134, 1
      %p138 = scmp.eq.s32.totalorder %s16, 1
      %p139 = scmp.ne.s32.totalorder %s134, %s136
      %p140 = scmp.eq.s32.totalorder %s16, 0
      %p141 = por %p139, %p140
      %p142 = scmp.ne.s32.totalorder %s134, %s136
      %p143 = scmp.eq.s32.totalorder %s21, 1
      %p144 = por %p142, %p143
      %p145 = scmp.ne.s32.totalorder %s136, %s137
      %p146 = scmp.eq.s32.totalorder %s21, 0
      %p147 = por %p145, %p146
      %p148 = scmp.ne.s32.totalorder %s136, %s137
      %p149 = scmp.eq.s32.totalorder %s22, 1
      %p150 = por %p148, %p149
      %p152 = scmp.ne.s32.totalorder %s137, %s151
      %p153 = scmp.eq.s32.totalorder %s22, 0
      %p154 = por %p152, %p153
      %s155 = ssub.s32 %s16, %s23
      %p156 = scmp.eq.s32.totalorder %s155, 0
      %s158 = sadd.s32 %s157, 1
      %s159 = scalar_select %p156, %s157, %s158
      %p162 = pneg %p156
      %p163 = scmp.eq.s32.totalorder %s16, 1
      %p164 = por %p162, %p163
      %p165 = scmp.ne.s32.totalorder %s157, %s160
      %p166 = scmp.eq.s32.totalorder %s16, 0
      %p167 = por %p165, %p166
      %p168 = scmp.ne.s32.totalorder %s157, %s160
      %p169 = scmp.eq.s32.totalorder %s21, 1
      %p170 = por %p168, %p169
      %p171 = scmp.ne.s32.totalorder %s160, %s161
      %p172 = scmp.eq.s32.totalorder %s21, 0
      %p173 = por %p171, %p172
      %p174 = scmp.ne.s32.totalorder %s160, %s161
      %p175 = scmp.eq.s32.totalorder %s22, 1
      %p176 = por %p174, %p175
      %p178 = scmp.ne.s32.totalorder %s161, %s177
      %p179 = scmp.eq.s32.totalorder %s22, 0
      %p180 = por %p178, %p179
      %p181 = scmp.le.s32.totalorder 1, %s16
      %p182 = scmp.lt.s32.totalorder %s16, 3
      %p183 = pnand %p181, %p182
      %p184 = pneg %p183
      // Predicated region
      $region9: #{tpu_custom_call.1} parent=5 // pred_check
        _
      $region10: #{tpu_custom_call.1} parent=5 // pred_check_branch
        %186 = sbr.rel (%p183) target = $region12
      $region11: #{tpu_custom_call.1} parent=5 // pred_region
        %s187 = ssub.s32 %s16, 1
        // Predicated region
        $region13: #{tpu_custom_call.1} parent=11 // pred_check
          %p188 = pneg %p63
        $region14: #{tpu_custom_call.1} parent=11 // pred_check_branch
          %190 = sbr.rel (%p188) target = $region16
        $region15: #{tpu_custom_call.1} parent=11 // pred_region
          %192 = vsyncadd [#allocation5], 0
          %s193 = sshll.u32 %s1, 4
          %s194 = int_to_ptr.hbm [resolvable:$true] %s193
          %s195 = sshll.u32 [#allocation4], 4
          %s196 = int_to_ptr.vmem [resolvable:$true] %s195
          %201 = dma.hbm_to_vmem [thread:$0]  %s194, 256, %s196, [#allocation5], 128, 128, 8
        $region16: #{tpu_custom_call.1} parent=11 // pred_fallthru
          _
        // Predicated region
        $region17: #{tpu_custom_call.1} parent=11 // pred_check
          %p202 = pneg %p84
        $region18: #{tpu_custom_call.1} parent=11 // pred_check_branch
          %204 = sbr.rel (%p202) target = $region20
        $region19: #{tpu_custom_call.1} parent=11 // pred_region
          _
        $region20: #{tpu_custom_call.1} parent=11 // pred_fallthru
          _
        // Predicated region
        $region21: #{tpu_custom_call.1} parent=11 // pred_check
          %p205 = pneg %p105
        $region22: #{tpu_custom_call.1} parent=11 // pred_check_branch
          %207 = sbr.rel (%p205) target = $region24
        $region23: #{tpu_custom_call.1} parent=11 // pred_region
          _
        $region24: #{tpu_custom_call.1} parent=11 // pred_fallthru
          _
        // Predicated region
        $region25: #{tpu_custom_call.1} parent=11 // pred_check
          %p208 = pneg %p126
        $region26: #{tpu_custom_call.1} parent=11 // pred_check_branch
          %210 = sbr.rel (%p208) target = $region28
        $region27: #{tpu_custom_call.1} parent=11 // pred_region
          _
        $region28: #{tpu_custom_call.1} parent=11 // pred_fallthru
          _
        // Predicated region
        $region29: #{tpu_custom_call.1} parent=11 // pred_check
          %p211 = pneg %p147
        $region30: #{tpu_custom_call.1} parent=11 // pred_check_branch
          %213 = sbr.rel (%p211) target = $region32
        $region31: #{tpu_custom_call.1} parent=11 // pred_region
          _
        $region32: #{tpu_custom_call.1} parent=11 // pred_fallthru
          _
      $region12: #{tpu_custom_call.1} parent=5 // pred_fallthru
        _
      %p214 = scmp.lt.s32.totalorder %s16, 2
      // Predicated region
      $region33: #{tpu_custom_call.1} parent=5 // pred_check
        %p215 = pneg %p214
      $region34: #{tpu_custom_call.1} parent=5 // pred_check_branch
        %217 = sbr.rel (%p215) target = $region36
      $region35: #{tpu_custom_call.1} parent=5 // pred_region
        // Predicated region
        $region37: #{tpu_custom_call.1} parent=35 // pred_check
          %p218 = pneg %p36
        $region38: #{tpu_custom_call.1} parent=35 // pred_check_branch
          %220 = sbr.rel (%p218) target = $region40
        $region39: #{tpu_custom_call.1} parent=35 // pred_region
          %s221 = sand.u32 %s26, 1
          %s222 = scalar_lea.sflag [#allocation3], %s221
          %s223 = sand.u32 %s26, 1
          %s224 = smul.addr %s223, 256
          %s225 = scalar_lea.vmem [#allocation2], %s224
          %227 = vsyncadd %s222, 0
          %s228 = smul.addr %s16, 8
          %s229 = scalar_lea.hbm %s0, %s228
          %s230 = sshll.u32 %s229, 4
          %s231 = int_to_ptr.hbm [resolvable:$true] %s230
          %s232 = sshll.u32 %s225, 4
          %s233 = int_to_ptr.vmem [resolvable:$true] %s232
          %238 = dma.hbm_to_vmem [thread:$0]  %s231, 4096, %s233, %s222, 256, 128, 8
        $region40: #{tpu_custom_call.1} parent=35 // pred_fallthru
          _
      $region36: #{tpu_custom_call.1} parent=5 // pred_fallthru
        _
      %p239 = scmp.le.s32.totalorder 1, %s16
      %p240 = scmp.lt.s32.totalorder %s16, 3
      %p241 = pnand %p239, %p240
      %p242 = pneg %p241
      // Predicated region
      $region41: #{tpu_custom_call.1} parent=5 // pred_check
        _
      $region42: #{tpu_custom_call.1} parent=5 // pred_check_branch
        %244 = sbr.rel (%p241) target = $region44
      $region43: #{tpu_custom_call.1} parent=5 // pred_region
        %s245 = ssub.s32 %s16, 1
        %s246 = sand.u32 %s29, 1
        %s247 = scalar_lea.sflag [#allocation3], %s246
        %s248 = sand.u32 %s29, 1
        %s249 = smul.addr %s248, 256
        %s250 = scalar_lea.vmem [#allocation2], %s249
        // Predicated region
        $region45: #{tpu_custom_call.1} parent=43 // pred_check
          %p251 = pneg %p42
        $region46: #{tpu_custom_call.1} parent=43 // pred_check_branch
          %253 = sbr.rel (%p251) target = $region48
        $region47: #{tpu_custom_call.1} parent=43 // pred_region
          %255 = dma.done %s247, 4096
        $region48: #{tpu_custom_call.1} parent=43 // pred_fallthru
          _
        // Predicated region
        $region49: #{tpu_custom_call.1} parent=43 // pred_check
          %p256 = pneg %p63
        $region50: #{tpu_custom_call.1} parent=43 // pred_check_branch
          %258 = sbr.rel (%p256) target = $region52
        $region51: #{tpu_custom_call.1} parent=43 // pred_region
          %260 = dma.done [#allocation5], 256
        $region52: #{tpu_custom_call.1} parent=43 // pred_fallthru
          _
        %s261 = sand.u32 %s29, 1
        %s262 = scalar_lea.sflag [#allocation3], %s261
        %s263 = sand.u32 %s29, 1
        %s264 = smul.addr %s263, 256
        %s265 = scalar_lea.vmem [#allocation2], %s264
        %p266 = pneg %p42
        %p267 = pneg %p39
        %p268 = pneg %p63
        %p269 = pneg %p60
        %p270 = pneg %p84
        %p271 = pneg %p81
        %p272 = pneg %p105
        %p273 = pneg %p102
        %p274 = pneg %p126
        %p275 = pneg %p123
        %p276 = pneg %p147
        %p277 = pneg %p144
        %p278 = pneg %p173
        %p279 = pneg %p170
        %p280 = scmp.lt.s32.totalorder %s21, 1
        %s281 = scalar_select %p280, %s21, 1
        %s282 = smul.addr %s281, 8
        %s283 = scalar_lea.vmem %s6, %s282
        %p284 = scmp.lt.s32.totalorder %s21, 1
        %s285 = scalar_select %p284, %s21, 1
        %s286 = smul.addr %s285, 8
        %s287 = scalar_lea.vmem %s6, %s286
        %v288 = vld [vmem:[%s2] sm:$0xff]
        %v289 = vld [vmem:[%s2 + $0x8] sm:$0xff]
        %v290 = vld [vmem:[%s2 + $0x10] sm:$0xff]
        %v291 = vld [vmem:[%s2 + $0x18] sm:$0xff]
        %v292 = vld [vmem:[%s250] sm:$0xff]
        %v293 = vld [vmem:[%s250 + $0x8] sm:$0xff]
        %v294 = vld [vmem:[%s250 + $0x10] sm:$0xff]
        %v295 = vld [vmem:[%s250 + $0x18] sm:$0xff]
        %v296 = vld [vmem:[%s250 + $0x20] sm:$0xff]
        %v297 = vld [vmem:[%s250 + $0x28] sm:$0xff]
        %v298 = vld [vmem:[%s250 + $0x30] sm:$0xff]
        %v299 = vld [vmem:[%s250 + $0x38] sm:$0xff]
        %v300 = vld [vmem:[%s250 + $0x40] sm:$0xff]
        %v301 = vld [vmem:[%s250 + $0x48] sm:$0xff]
        %v302 = vld [vmem:[%s250 + $0x50] sm:$0xff]
        %v303 = vld [vmem:[%s250 + $0x58] sm:$0xff]
        %v304 = vld [vmem:[%s250 + $0x60] sm:$0xff]
        %v305 = vld [vmem:[%s250 + $0x68] sm:$0xff]
        %v306 = vld [vmem:[%s250 + $0x70] sm:$0xff]
        %v307 = vld [vmem:[%s250 + $0x78] sm:$0xff]
        %v308 = vld [vmem:[%s250 + $0x80] sm:$0xff]
        %v309 = vld [vmem:[%s250 + $0x88] sm:$0xff]
        %v310 = vld [vmem:[%s250 + $0x90] sm:$0xff]
        %v311 = vld [vmem:[%s250 + $0x98] sm:$0xff]
        %v312 = vld [vmem:[%s250 + $0xa0] sm:$0xff]
        %v313 = vld [vmem:[%s250 + $0xa8] sm:$0xff]
        %v314 = vld [vmem:[%s250 + $0xb0] sm:$0xff]
        %v315 = vld [vmem:[%s250 + $0xb8] sm:$0xff]
        %v316 = vld [vmem:[%s250 + $0xc0] sm:$0xff]
        %v317 = vld [vmem:[%s250 + $0xc8] sm:$0xff]
        %v318 = vld [vmem:[%s250 + $0xd0] sm:$0xff]
        %v319 = vld [vmem:[%s250 + $0xd8] sm:$0xff]
        %v320 = vld [vmem:[%s250 + $0xe0] sm:$0xff]
        %v321 = vld [vmem:[%s250 + $0xe8] sm:$0xff]
        %v322 = vld [vmem:[%s250 + $0xf0] sm:$0xff]
        %v323 = vld [vmem:[%s250 + $0xf8] sm:$0xff]
        %v324 = vld [vmem:[#allocation4] sm:$0xff]
        %v325 = vld [vmem:[#allocation4 + $0x8] sm:$0xff]
        %v326 = vld [vmem:[%s3] sm:$0x1]
        %v328 = vperm.slane %v326, 0
        %vm330 = vcmask 130048
        %v332 = vsel %vm330, %v292, 0
        %v335 = vsel %vm330, %v293, 0
        %v338 = vsel %vm330, %v294, 0
        %v341 = vsel %vm330, %v295, 0
        %v344 = vsel %vm330, %v296, 0
        %v347 = vsel %vm330, %v297, 0
        %v350 = vsel %vm330, %v298, 0
        %v353 = vsel %vm330, %v299, 0
        %v356 = vsel %vm330, %v300, 0
        %v359 = vsel %vm330, %v301, 0
        %v362 = vsel %vm330, %v302, 0
        %v365 = vsel %vm330, %v303, 0
        %v368 = vsel %vm330, %v304, 0
        %v371 = vsel %vm330, %v305, 0
        %v374 = vsel %vm330, %v306, 0
        %v377 = vsel %vm330, %v307, 0
        %v380 = vsel %vm330, %v308, 0
        %v383 = vsel %vm330, %v309, 0
        %v386 = vsel %vm330, %v310, 0
        %v389 = vsel %vm330, %v311, 0
        %v392 = vsel %vm330, %v312, 0
        %v395 = vsel %vm330, %v313, 0
        %v398 = vsel %vm330, %v314, 0
        %v401 = vsel %vm330, %v315, 0
        %v404 = vsel %vm330, %v316, 0
        %v407 = vsel %vm330, %v317, 0
        %v410 = vsel %vm330, %v318, 0
        %v413 = vsel %vm330, %v319, 0
        %v416 = vsel %vm330, %v320, 0
        %v419 = vsel %vm330, %v321, 0
        %v422 = vsel %vm330, %v322, 0
        %v425 = vsel %vm330, %v323, 0
        %427 = vmatpush.msra.mxu0 0.0
        %428 = vmatpush.msra.mxu0 0.0
        %429 = vmatpush.msra.mxu0 0.0
        %430 = vmatpush.msra.mxu0 0.0
        %431 = vmatpush.msra.mxu0 0.0
        %432 = vmatpush.msra.mxu0 0.0
        %433 = vmatpush.msra.mxu0 0.0
        %434 = vmatpush.msra.mxu0 0.0
        %435 = vmatpush.msra.mxu0 0.0
        %436 = vmatpush.msra.mxu0 0.0
        %437 = vmatpush.msra.mxu0 0.0
        %438 = vmatpush.msra.mxu0 0.0
        %439 = vmatpush.msra.mxu0 0.0
        %440 = vmatpush.msra.mxu0 0.0
        %441 = vmatpush.msra.mxu0 %v325
        %442 = vmatpush.msra.mxu0 %v324
        %443 = vmatmul.f32.gmra.mxu0 %v332
        %v444 = vpop.f32.mrf.mxu0
        %v445 = vadd.f32 %v328, %v444
        %446 = vmatmul.f32.gmra.mxu0 %v335
        %v447 = vpop.f32.mrf.mxu0
        %v448 = vadd.f32 %v328, %v447
        %449 = vmatmul.f32.gmra.mxu0 %v338
        %v450 = vpop.f32.mrf.mxu0
        %v451 = vadd.f32 %v328, %v450
        %452 = vmatmul.f32.gmra.mxu0 %v341
        %v453 = vpop.f32.mrf.mxu0
        %v454 = vadd.f32 %v328, %v453
        %455 = vmatmul.f32.gmra.mxu0 %v344
        %v456 = vpop.f32.mrf.mxu0
        %v457 = vadd.f32 %v328, %v456
        %458 = vmatmul.f32.gmra.mxu0 %v347
        %v459 = vpop.f32.mrf.mxu0
        %v460 = vadd.f32 %v328, %v459
        %461 = vmatmul.f32.gmra.mxu0 %v350
        %v462 = vpop.f32.mrf.mxu0
        %v463 = vadd.f32 %v328, %v462
        %464 = vmatmul.f32.gmra.mxu0 %v353
        %v465 = vpop.f32.mrf.mxu0
        %v466 = vadd.f32 %v328, %v465
        %467 = vmatmul.f32.gmra.mxu0 %v356
        %v468 = vpop.f32.mrf.mxu0
        %v469 = vadd.f32 %v328, %v468
        %470 = vmatmul.f32.gmra.mxu0 %v359
        %v471 = vpop.f32.mrf.mxu0
        %v472 = vadd.f32 %v328, %v471
        %473 = vmatmul.f32.gmra.mxu0 %v362
        %v474 = vpop.f32.mrf.mxu0
        %v475 = vadd.f32 %v328, %v474
        %476 = vmatmul.f32.gmra.mxu0 %v365
        %v477 = vpop.f32.mrf.mxu0
        %v478 = vadd.f32 %v328, %v477
        %479 = vmatmul.f32.gmra.mxu0 %v368
        %v480 = vpop.f32.mrf.mxu0
        %v481 = vadd.f32 %v328, %v480
        %482 = vmatmul.f32.gmra.mxu0 %v371
        %v483 = vpop.f32.mrf.mxu0
        %v484 = vadd.f32 %v328, %v483
        %485 = vmatmul.f32.gmra.mxu0 %v374
        %v486 = vpop.f32.mrf.mxu0
        %v487 = vadd.f32 %v328, %v486
        %488 = vmatmul.f32.gmra.mxu0 %v377
        %v489 = vpop.f32.mrf.mxu0
        %v490 = vadd.f32 %v328, %v489
        %491 = vmatmul.f32.gmra.mxu0 %v380
        %v492 = vpop.f32.mrf.mxu0
        %v493 = vadd.f32 %v328, %v492
        %494 = vmatmul.f32.gmra.mxu0 %v383
        %v495 = vpop.f32.mrf.mxu0
        %v496 = vadd.f32 %v328, %v495
        %497 = vmatmul.f32.gmra.mxu0 %v386
        %v498 = vpop.f32.mrf.mxu0
        %v499 = vadd.f32 %v328, %v498
        %500 = vmatmul.f32.gmra.mxu0 %v389
        %v501 = vpop.f32.mrf.mxu0
        %v502 = vadd.f32 %v328, %v501
        %503 = vmatmul.f32.gmra.mxu0 %v392
        %v504 = vpop.f32.mrf.mxu0
        %v505 = vadd.f32 %v328, %v504
        %506 = vmatmul.f32.gmra.mxu0 %v395
        %v507 = vpop.f32.mrf.mxu0
        %v508 = vadd.f32 %v328, %v507
        %509 = vmatmul.f32.gmra.mxu0 %v398
        %v510 = vpop.f32.mrf.mxu0
        %v511 = vadd.f32 %v328, %v510
        %512 = vmatmul.f32.gmra.mxu0 %v401
        %v513 = vpop.f32.mrf.mxu0
        %v514 = vadd.f32 %v328, %v513
        %515 = vmatmul.f32.gmra.mxu0 %v404
        %v516 = vpop.f32.mrf.mxu0
        %v517 = vadd.f32 %v328, %v516
        %518 = vmatmul.f32.gmra.mxu0 %v407
        %v519 = vpop.f32.mrf.mxu0
        %v520 = vadd.f32 %v328, %v519
        %521 = vmatmul.f32.gmra.mxu0 %v410
        %v522 = vpop.f32.mrf.mxu0
        %v523 = vadd.f32 %v328, %v522
        %524 = vmatmul.f32.gmra.mxu0 %v413
        %v525 = vpop.f32.mrf.mxu0
        %v526 = vadd.f32 %v328, %v525
        %527 = vmatmul.f32.gmra.mxu0 %v416
        %v528 = vpop.f32.mrf.mxu0
        %v529 = vadd.f32 %v328, %v528
        %530 = vmatmul.f32.gmra.mxu0 %v419
        %v531 = vpop.f32.mrf.mxu0
        %v532 = vadd.f32 %v328, %v531
        %533 = vmatmul.f32.gmra.mxu0 %v422
        %v534 = vpop.f32.mrf.mxu0
        %v535 = vadd.f32 %v328, %v534
        %536 = vmatmul.f32.gmra.mxu0 %v425
        %v537 = vpop.f32.mrf.mxu0
        %v538 = vadd.f32 %v328, %v537
        %539 = vdwg.mxu0
        %vm540 = vcmask 261120
        %v542 = vsel %vm540, 0.0, 0
        %544 = vmatpush.msra.mxu0 0.0
        %545 = vmatpush.msra.mxu0 0.0
        %546 = vmatpush.msra.mxu0 0.0
        %547 = vmatpush.msra.mxu0 0.0
        %548 = vmatpush.msra.mxu0 0.0
        %549 = vmatpush.msra.mxu0 0.0
        %550 = vmatpush.msra.mxu0 0.0
        %551 = vmatpush.msra.mxu0 0.0
        %552 = vmatpush.msra.mxu0 0.0
        %553 = vmatpush.msra.mxu0 0.0
        %554 = vmatpush.msra.mxu0 0.0
        %555 = vmatpush.msra.mxu0 0.0
        %556 = vmatpush.msra.mxu0 %v291
        %557 = vmatpush.msra.mxu0 %v290
        %558 = vmatpush.msra.mxu0 %v289
        %559 = vmatpush.msra.mxu0 %v288
        %560 = vmatmul.f32.gmra.mxu0 %v542
        %v561 = vpop.f32.mrf.mxu0
        %v562 = vadd.f32 0.0, %v561
        %563 = vmatmul.f32.gmra.mxu0 %v542
        %v564 = vpop.f32.mrf.mxu0
        %v565 = vadd.f32 0.0, %v564
        %566 = vmatmul.f32.gmra.mxu0 %v542
        %v567 = vpop.f32.mrf.mxu0
        %v568 = vadd.f32 0.0, %v567
        %569 = vmatmul.f32.gmra.mxu0 %v542
        %v570 = vpop.f32.mrf.mxu0
        %v571 = vadd.f32 0.0, %v570
        %572 = vdwg.mxu0
        %v573 = vadd.f32 %v445, %v562
        %v574 = vadd.f32 %v448, %v565
        %v575 = vadd.f32 %v451, %v568
        %v576 = vadd.f32 %v454, %v571
        %v577 = vxor.u32 %v573, 2147483648
        %v578 = vxor.u32 %v574, 2147483648
        %v579 = vxor.u32 %v575, 2147483648
        %v580 = vxor.u32 %v576, 2147483648
        %v581 = vmul.f32 %v577, 1.442695
        %v582 = vpow.pop %v581
        %v583 = vmul.f32 %v578, 1.442695
        %v584 = vpow.pop %v583
        %v585 = vmul.f32 %v579, 1.442695
        %v586 = vpow.pop %v585
        %v587 = vmul.f32 %v580, 1.442695
        %v588 = vpow.pop %v587
        %v589 = vadd.f32 %v582, 1.0
        %v590 = vadd.f32 %v584, 1.0
        %v591 = vadd.f32 %v586, 1.0
        %v592 = vadd.f32 %v588, 1.0
        %v593 = vrcp.pop %v589
        %v594 = vmul.f32 %v589, %v593
        %v595 = vsub.f32 1.0, %v594
        %v596 = vmul.f32 %v593, %v595
        %v597 = vadd.f32 %v593, %v596
        %vm598 = vweird.f32 %v589
        %vm599 = vweird.f32 %v593
        %vm600 = vmor %vm598, %vm599
        %v601 = vsel %vm600, %v593, %v597
        %v602 = vand.u32 2147483647, %v589
        %vm603 = vcmp.eq.f32.partialorder %v602, 8.507059e+37
        %v604 = vand.u32 %v589, 2147483648
        %v605 = vor.u32 1.1754944e-38, %v604
        %v606 = vsel %vm603, %v605, %v601
        %v607 = vmul.f32 1.0, %v606
        %v608 = vrcp.pop %v590
        %v609 = vmul.f32 %v590, %v608
        %v610 = vsub.f32 1.0, %v609
        %v611 = vmul.f32 %v608, %v610
        %v612 = vadd.f32 %v608, %v611
        %vm613 = vweird.f32 %v590
        %vm614 = vweird.f32 %v608
        %vm615 = vmor %vm613, %vm614
        %v616 = vsel %vm615, %v608, %v612
        %v617 = vand.u32 2147483647, %v590
        %vm618 = vcmp.eq.f32.partialorder %v617, 8.507059e+37
        %v619 = vand.u32 %v590, 2147483648
        %v620 = vor.u32 1.1754944e-38, %v619
        %v621 = vsel %vm618, %v620, %v616
        %v622 = vmul.f32 1.0, %v621
        %v623 = vrcp.pop %v591
        %v624 = vmul.f32 %v591, %v623
        %v625 = vsub.f32 1.0, %v624
        %v626 = vmul.f32 %v623, %v625
        %v627 = vadd.f32 %v623, %v626
        %vm628 = vweird.f32 %v591
        %vm629 = vweird.f32 %v623
        %vm630 = vmor %vm628, %vm629
        %v631 = vsel %vm630, %v623, %v627
        %v632 = vand.u32 2147483647, %v591
        %vm633 = vcmp.eq.f32.partialorder %v632, 8.507059e+37
        %v634 = vand.u32 %v591, 2147483648
        %v635 = vor.u32 1.1754944e-38, %v634
        %v636 = vsel %vm633, %v635, %v631
        %v637 = vmul.f32 1.0, %v636
        %v638 = vrcp.pop %v592
        %v639 = vmul.f32 %v592, %v638
        %v640 = vsub.f32 1.0, %v639
        %v641 = vmul.f32 %v638, %v640
        %v642 = vadd.f32 %v638, %v641
        %vm643 = vweird.f32 %v592
        %vm644 = vweird.f32 %v638
        %vm645 = vmor %vm643, %vm644
        %v646 = vsel %vm645, %v638, %v642
        %v647 = vand.u32 2147483647, %v592
        %vm648 = vcmp.eq.f32.partialorder %v647, 8.507059e+37
        %v649 = vand.u32 %v592, 2147483648
        %v650 = vor.u32 1.1754944e-38, %v649
        %v651 = vsel %vm648, %v650, %v646
        %v652 = vmul.f32 1.0, %v651
        %v653 = vtanh.pop %v573
        %v654 = vtanh.pop %v574
        %v655 = vtanh.pop %v575
        %v656 = vtanh.pop %v576
        %v657 = vmul.f32 %v607, 0.0
        %v658 = vmul.f32 %v622, 0.0
        %v659 = vmul.f32 %v637, 0.0
        %v660 = vmul.f32 %v652, 0.0
        %665 = vrot.lane.b32.xlu0 %v653, 64
        %v666 = vpop.permute.xlu0 %665
        %667 = vrot.lane.b32.xlu0 %v654, 64
        %v668 = vpop.permute.xlu0 %667
        %669 = vrot.lane.b32.xlu0 %v655, 64
        %v670 = vpop.permute.xlu0 %669
        %671 = vrot.lane.b32.xlu0 %v656, 64
        %v672 = vpop.permute.xlu0 %671
        %v677 = vmul.f32 %v607, %v666
        %v678 = vmul.f32 %v622, %v668
        %v679 = vmul.f32 %v637, %v670
        %v680 = vmul.f32 %v652, %v672
        %685 = vrot.lane.b32.xlu0 %v677, 32
        %v686 = vpop.permute.xlu0 %685
        %687 = vrot.lane.b32.xlu0 %v678, 32
        %v688 = vpop.permute.xlu0 %687
        %689 = vrot.lane.b32.xlu0 %v679, 32
        %v690 = vpop.permute.xlu0 %689
        %691 = vrot.lane.b32.xlu0 %v680, 32
        %v692 = vpop.permute.xlu0 %691
        %v697 = vadd.f32 %v657, %v686
        %v698 = vadd.f32 %v658, %v688
        %v699 = vadd.f32 %v659, %v690
        %v700 = vadd.f32 %v660, %v692
        %v701 = vtanh.pop %v697
        %v702 = vtanh.pop %v698
        %v703 = vtanh.pop %v699
        %v704 = vtanh.pop %v700
        %709 = vrot.lane.b32.xlu0 %v701, 64
        %v710 = vpop.permute.xlu0 %709
        %711 = vrot.lane.b32.xlu0 %v702, 64
        %v712 = vpop.permute.xlu0 %711
        %713 = vrot.lane.b32.xlu0 %v703, 64
        %v714 = vpop.permute.xlu0 %713
        %715 = vrot.lane.b32.xlu0 %v704, 64
        %v716 = vpop.permute.xlu0 %715
        %v721 = vmul.f32 %v607, %v710
        %v722 = vmul.f32 %v622, %v712
        %v723 = vmul.f32 %v637, %v714
        %v724 = vmul.f32 %v652, %v716
        %729 = vrot.lane.b32.xlu0 %v721, 32
        %v730 = vpop.permute.xlu0 %729
        %731 = vrot.lane.b32.xlu0 %v722, 32
        %v732 = vpop.permute.xlu0 %731
        %733 = vrot.lane.b32.xlu0 %v723, 32
        %v734 = vpop.permute.xlu0 %733
        %735 = vrot.lane.b32.xlu0 %v724, 32
        %v736 = vpop.permute.xlu0 %735
        %v737 = vsel %vm540, %v730, 0
        %v739 = vsel %vm540, %v732, 0
        %v741 = vsel %vm540, %v734, 0
        %v743 = vsel %vm540, %v736, 0
        %745 = vmatpush.msra.mxu0 0.0
        %746 = vmatpush.msra.mxu0 0.0
        %747 = vmatpush.msra.mxu0 0.0
        %748 = vmatpush.msra.mxu0 0.0
        %749 = vmatpush.msra.mxu0 0.0
        %750 = vmatpush.msra.mxu0 0.0
        %751 = vmatpush.msra.mxu0 0.0
        %752 = vmatpush.msra.mxu0 0.0
        %753 = vmatpush.msra.mxu0 0.0
        %754 = vmatpush.msra.mxu0 0.0
        %755 = vmatpush.msra.mxu0 0.0
        %756 = vmatpush.msra.mxu0 0.0
        %757 = vmatpush.msra.mxu0 %v291
        %758 = vmatpush.msra.mxu0 %v290
        %759 = vmatpush.msra.mxu0 %v289
        %760 = vmatpush.msra.mxu0 %v288
        %761 = vmatmul.f32.gmra.mxu0 %v737
        %v762 = vpop.f32.mrf.mxu0
        %v763 = vadd.f32 0.0, %v762
        %764 = vmatmul.f32.gmra.mxu0 %v739
        %v765 = vpop.f32.mrf.mxu0
        %v766 = vadd.f32 0.0, %v765
        %767 = vmatmul.f32.gmra.mxu0 %v741
        %v768 = vpop.f32.mrf.mxu0
        %v769 = vadd.f32 0.0, %v768
        %770 = vmatmul.f32.gmra.mxu0 %v743
        %v771 = vpop.f32.mrf.mxu0
        %v772 = vadd.f32 0.0, %v771
        %773 = vdwg.mxu0
        %v774 = vadd.f32 %v457, %v763
        %v775 = vadd.f32 %v460, %v766
        %v776 = vadd.f32 %v463, %v769
        %v777 = vadd.f32 %v466, %v772
        %v778 = vxor.u32 %v774, 2147483648
        %v779 = vxor.u32 %v775, 2147483648
        %v780 = vxor.u32 %v776, 2147483648
        %v781 = vxor.u32 %v777, 2147483648
        %v782 = vmul.f32 %v778, 1.442695
        %v783 = vpow.pop %v782
        %v784 = vmul.f32 %v779, 1.442695
        %v785 = vpow.pop %v784
        %v786 = vmul.f32 %v780, 1.442695
        %v787 = vpow.pop %v786
        %v788 = vmul.f32 %v781, 1.442695
        %v789 = vpow.pop %v788
        %v790 = vadd.f32 %v783, 1.0
        %v791 = vadd.f32 %v785, 1.0
        %v792 = vadd.f32 %v787, 1.0
        %v793 = vadd.f32 %v789, 1.0
        %v794 = vrcp.pop %v790
        %v795 = vmul.f32 %v790, %v794
        %v796 = vsub.f32 1.0, %v795
        %v797 = vmul.f32 %v794, %v796
        %v798 = vadd.f32 %v794, %v797
        %vm799 = vweird.f32 %v790
        %vm800 = vweird.f32 %v794
        %vm801 = vmor %vm799, %vm800
        %v802 = vsel %vm801, %v794, %v798
        %v803 = vand.u32 2147483647, %v790
        %vm804 = vcmp.eq.f32.partialorder %v803, 8.507059e+37
        %v805 = vand.u32 %v790, 2147483648
        %v806 = vor.u32 1.1754944e-38, %v805
        %v807 = vsel %vm804, %v806, %v802
        %v808 = vmul.f32 1.0, %v807
        %v809 = vrcp.pop %v791
        %v810 = vmul.f32 %v791, %v809
        %v811 = vsub.f32 1.0, %v810
        %v812 = vmul.f32 %v809, %v811
        %v813 = vadd.f32 %v809, %v812
        %vm814 = vweird.f32 %v791
        %vm815 = vweird.f32 %v809
        %vm816 = vmor %vm814, %vm815
        %v817 = vsel %vm816, %v809, %v813
        %v818 = vand.u32 2147483647, %v791
        %vm819 = vcmp.eq.f32.partialorder %v818, 8.507059e+37
        %v820 = vand.u32 %v791, 2147483648
        %v821 = vor.u32 1.1754944e-38, %v820
        %v822 = vsel %vm819, %v821, %v817
        %v823 = vmul.f32 1.0, %v822
        %v824 = vrcp.pop %v792
        %v825 = vmul.f32 %v792, %v824
        %v826 = vsub.f32 1.0, %v825
        %v827 = vmul.f32 %v824, %v826
        %v828 = vadd.f32 %v824, %v827
        %vm829 = vweird.f32 %v792
        %vm830 = vweird.f32 %v824
        %vm831 = vmor %vm829, %vm830
        %v832 = vsel %vm831, %v824, %v828
        %v833 = vand.u32 2147483647, %v792
        %vm834 = vcmp.eq.f32.partialorder %v833, 8.507059e+37
        %v835 = vand.u32 %v792, 2147483648
        %v836 = vor.u32 1.1754944e-38, %v835
        %v837 = vsel %vm834, %v836, %v832
        %v838 = vmul.f32 1.0, %v837
        %v839 = vrcp.pop %v793
        %v840 = vmul.f32 %v793, %v839
        %v841 = vsub.f32 1.0, %v840
        %v842 = vmul.f32 %v839, %v841
        %v843 = vadd.f32 %v839, %v842
        %vm844 = vweird.f32 %v793
        %vm845 = vweird.f32 %v839
        %vm846 = vmor %vm844, %vm845
        %v847 = vsel %vm846, %v839, %v843
        %v848 = vand.u32 2147483647, %v793
        %vm849 = vcmp.eq.f32.partialorder %v848, 8.507059e+37
        %v850 = vand.u32 %v793, 2147483648
        %v851 = vor.u32 1.1754944e-38, %v850
        %v852 = vsel %vm849, %v851, %v847
        %v853 = vmul.f32 1.0, %v852
        %v854 = vtanh.pop %v774
        %v855 = vtanh.pop %v775
        %v856 = vtanh.pop %v776
        %v857 = vtanh.pop %v777
        %v858 = vmul.f32 %v808, %v697
        %v859 = vmul.f32 %v823, %v698
        %v860 = vmul.f32 %v838, %v699
        %v861 = vmul.f32 %v853, %v700
        %866 = vrot.lane.b32.xlu0 %v854, 64
        %v867 = vpop.permute.xlu0 %866
        %868 = vrot.lane.b32.xlu0 %v855, 64
        %v869 = vpop.permute.xlu0 %868
        %870 = vrot.lane.b32.xlu0 %v856, 64
        %v871 = vpop.permute.xlu0 %870
        %872 = vrot.lane.b32.xlu0 %v857, 64
        %v873 = vpop.permute.xlu0 %872
        %v878 = vmul.f32 %v808, %v867
        %v879 = vmul.f32 %v823, %v869
        %v880 = vmul.f32 %v838, %v871
        %v881 = vmul.f32 %v853, %v873
        %886 = vrot.lane.b32.xlu0 %v878, 32
        %v887 = vpop.permute.xlu0 %886
        %888 = vrot.lane.b32.xlu0 %v879, 32
        %v889 = vpop.permute.xlu0 %888
        %890 = vrot.lane.b32.xlu0 %v880, 32
        %v891 = vpop.permute.xlu0 %890
        %892 = vrot.lane.b32.xlu0 %v881, 32
        %v893 = vpop.permute.xlu0 %892
        %v898 = vadd.f32 %v858, %v887
        %v899 = vadd.f32 %v859, %v889
        %v900 = vadd.f32 %v860, %v891
        %v901 = vadd.f32 %v861, %v893
        %v902 = vtanh.pop %v898
        %v903 = vtanh.pop %v899
        %v904 = vtanh.pop %v900
        %v905 = vtanh.pop %v901
        %910 = vrot.lane.b32.xlu0 %v902, 64
        %v911 = vpop.permute.xlu0 %910
        %912 = vrot.lane.b32.xlu0 %v903, 64
        %v913 = vpop.permute.xlu0 %912
        %914 = vrot.lane.b32.xlu0 %v904, 64
        %v915 = vpop.permute.xlu0 %914
        %916 = vrot.lane.b32.xlu0 %v905, 64
        %v917 = vpop.permute.xlu0 %916
        %v922 = vmul.f32 %v808, %v911
        %v923 = vmul.f32 %v823, %v913
        %v924 = vmul.f32 %v838, %v915
        %v925 = vmul.f32 %v853, %v917
        %930 = vrot.lane.b32.xlu0 %v922, 32
        %v931 = vpop.permute.xlu0 %930
        %932 = vrot.lane.b32.xlu0 %v923, 32
        %v933 = vpop.permute.xlu0 %932
        %934 = vrot.lane.b32.xlu0 %v924, 32
        %v935 = vpop.permute.xlu0 %934
        %936 = vrot.lane.b32.xlu0 %v925, 32
        %v937 = vpop.permute.xlu0 %936
        %v938 = vsel %vm540, %v931, 0
        %v940 = vsel %vm540, %v933, 0
        %v942 = vsel %vm540, %v935, 0
        %v944 = vsel %vm540, %v937, 0
        %946 = vmatpush.msra.mxu0 0.0
        %947 = vmatpush.msra.mxu0 0.0
        %948 = vmatpush.msra.mxu0 0.0
        %949 = vmatpush.msra.mxu0 0.0
        %950 = vmatpush.msra.mxu0 0.0
        %951 = vmatpush.msra.mxu0 0.0
        %952 = vmatpush.msra.mxu0 0.0
        %953 = vmatpush.msra.mxu0 0.0
        %954 = vmatpush.msra.mxu0 0.0
        %955 = vmatpush.msra.mxu0 0.0
        %956 = vmatpush.msra.mxu0 0.0
        %957 = vmatpush.msra.mxu0 0.0
        %958 = vmatpush.msra.mxu0 %v291
        %959 = vmatpush.msra.mxu0 %v290
        %960 = vmatpush.msra.mxu0 %v289
        %961 = vmatpush.msra.mxu0 %v288
        %962 = vmatmul.f32.gmra.mxu0 %v938
        %v963 = vpop.f32.mrf.mxu0
        %v964 = vadd.f32 0.0, %v963
        %965 = vmatmul.f32.gmra.mxu0 %v940
        %v966 = vpop.f32.mrf.mxu0
        %v967 = vadd.f32 0.0, %v966
        %968 = vmatmul.f32.gmra.mxu0 %v942
        %v969 = vpop.f32.mrf.mxu0
        %v970 = vadd.f32 0.0, %v969
        %971 = vmatmul.f32.gmra.mxu0 %v944
        %v972 = vpop.f32.mrf.mxu0
        %v973 = vadd.f32 0.0, %v972
        %974 = vdwg.mxu0
        %v975 = vadd.f32 %v469, %v964
        %v976 = vadd.f32 %v472, %v967
        %v977 = vadd.f32 %v475, %v970
        %v978 = vadd.f32 %v478, %v973
        %v979 = vxor.u32 %v975, 2147483648
        %v980 = vxor.u32 %v976, 2147483648
        %v981 = vxor.u32 %v977, 2147483648
        %v982 = vxor.u32 %v978, 2147483648
        %v983 = vmul.f32 %v979, 1.442695
        %v984 = vpow.pop %v983
        %v985 = vmul.f32 %v980, 1.442695
        %v986 = vpow.pop %v985
        %v987 = vmul.f32 %v981, 1.442695
        %v988 = vpow.pop %v987
        %v989 = vmul.f32 %v982, 1.442695
        %v990 = vpow.pop %v989
        %v991 = vadd.f32 %v984, 1.0
        %v992 = vadd.f32 %v986, 1.0
        %v993 = vadd.f32 %v988, 1.0
        %v994 = vadd.f32 %v990, 1.0
        %v995 = vrcp.pop %v991
        %v996 = vmul.f32 %v991, %v995
        %v997 = vsub.f32 1.0, %v996
        %v998 = vmul.f32 %v995, %v997
        %v999 = vadd.f32 %v995, %v998
        %vm1000 = vweird.f32 %v991
        %vm1001 = vweird.f32 %v995
        %vm1002 = vmor %vm1000, %vm1001
        %v1003 = vsel %vm1002, %v995, %v999
        %v1004 = vand.u32 2147483647, %v991
        %vm1005 = vcmp.eq.f32.partialorder %v1004, 8.507059e+37
        %v1006 = vand.u32 %v991, 2147483648
        %v1007 = vor.u32 1.1754944e-38, %v1006
        %v1008 = vsel %vm1005, %v1007, %v1003
        %v1009 = vmul.f32 1.0, %v1008
        %v1010 = vrcp.pop %v992
        %v1011 = vmul.f32 %v992, %v1010
        %v1012 = vsub.f32 1.0, %v1011
        %v1013 = vmul.f32 %v1010, %v1012
        %v1014 = vadd.f32 %v1010, %v1013
        %vm1015 = vweird.f32 %v992
        %vm1016 = vweird.f32 %v1010
        %vm1017 = vmor %vm1015, %vm1016
        %v1018 = vsel %vm1017, %v1010, %v1014
        %v1019 = vand.u32 2147483647, %v992
        %vm1020 = vcmp.eq.f32.partialorder %v1019, 8.507059e+37
        %v1021 = vand.u32 %v992, 2147483648
        %v1022 = vor.u32 1.1754944e-38, %v1021
        %v1023 = vsel %vm1020, %v1022, %v1018
        %v1024 = vmul.f32 1.0, %v1023
        %v1025 = vrcp.pop %v993
        %v1026 = vmul.f32 %v993, %v1025
        %v1027 = vsub.f32 1.0, %v1026
        %v1028 = vmul.f32 %v1025, %v1027
        %v1029 = vadd.f32 %v1025, %v1028
        %vm1030 = vweird.f32 %v993
        %vm1031 = vweird.f32 %v1025
        %vm1032 = vmor %vm1030, %vm1031
        %v1033 = vsel %vm1032, %v1025, %v1029
        %v1034 = vand.u32 2147483647, %v993
        %vm1035 = vcmp.eq.f32.partialorder %v1034, 8.507059e+37
        %v1036 = vand.u32 %v993, 2147483648
        %v1037 = vor.u32 1.1754944e-38, %v1036
        %v1038 = vsel %vm1035, %v1037, %v1033
        %v1039 = vmul.f32 1.0, %v1038
        %v1040 = vrcp.pop %v994
        %v1041 = vmul.f32 %v994, %v1040
        %v1042 = vsub.f32 1.0, %v1041
        %v1043 = vmul.f32 %v1040, %v1042
        %v1044 = vadd.f32 %v1040, %v1043
        %vm1045 = vweird.f32 %v994
        %vm1046 = vweird.f32 %v1040
        %vm1047 = vmor %vm1045, %vm1046
        %v1048 = vsel %vm1047, %v1040, %v1044
        %v1049 = vand.u32 2147483647, %v994
        %vm1050 = vcmp.eq.f32.partialorder %v1049, 8.507059e+37
        %v1051 = vand.u32 %v994, 2147483648
        %v1052 = vor.u32 1.1754944e-38, %v1051
        %v1053 = vsel %vm1050, %v1052, %v1048
        %v1054 = vmul.f32 1.0, %v1053
        %v1055 = vtanh.pop %v975
        %v1056 = vtanh.pop %v976
        %v1057 = vtanh.pop %v977
        %v1058 = vtanh.pop %v978
        %v1059 = vmul.f32 %v1009, %v898
        %v1060 = vmul.f32 %v1024, %v899
        %v1061 = vmul.f32 %v1039, %v900
        %v1062 = vmul.f32 %v1054, %v901
        %1067 = vrot.lane.b32.xlu0 %v1055, 64
        %v1068 = vpop.permute.xlu0 %1067
        %1069 = vrot.lane.b32.xlu0 %v1056, 64
        %v1070 = vpop.permute.xlu0 %1069
        %1071 = vrot.lane.b32.xlu0 %v1057, 64
        %v1072 = vpop.permute.xlu0 %1071
        %1073 = vrot.lane.b32.xlu0 %v1058, 64
        %v1074 = vpop.permute.xlu0 %1073
        %v1079 = vmul.f32 %v1009, %v1068
        %v1080 = vmul.f32 %v1024, %v1070
        %v1081 = vmul.f32 %v1039, %v1072
        %v1082 = vmul.f32 %v1054, %v1074
        %1087 = vrot.lane.b32.xlu0 %v1079, 32
        %v1088 = vpop.permute.xlu0 %1087
        %1089 = vrot.lane.b32.xlu0 %v1080, 32
        %v1090 = vpop.permute.xlu0 %1089
        %1091 = vrot.lane.b32.xlu0 %v1081, 32
        %v1092 = vpop.permute.xlu0 %1091
        %1093 = vrot.lane.b32.xlu0 %v1082, 32
        %v1094 = vpop.permute.xlu0 %1093
        %v1099 = vadd.f32 %v1059, %v1088
        %v1100 = vadd.f32 %v1060, %v1090
        %v1101 = vadd.f32 %v1061, %v1092
        %v1102 = vadd.f32 %v1062, %v1094
        %v1103 = vtanh.pop %v1099
        %v1104 = vtanh.pop %v1100
        %v1105 = vtanh.pop %v1101
        %v1106 = vtanh.pop %v1102
        %1111 = vrot.lane.b32.xlu0 %v1103, 64
        %v1112 = vpop.permute.xlu0 %1111
        %1113 = vrot.lane.b32.xlu0 %v1104, 64
        %v1114 = vpop.permute.xlu0 %1113
        %1115 = vrot.lane.b32.xlu0 %v1105, 64
        %v1116 = vpop.permute.xlu0 %1115
        %1117 = vrot.lane.b32.xlu0 %v1106, 64
        %v1118 = vpop.permute.xlu0 %1117
        %v1123 = vmul.f32 %v1009, %v1112
        %v1124 = vmul.f32 %v1024, %v1114
        %v1125 = vmul.f32 %v1039, %v1116
        %v1126 = vmul.f32 %v1054, %v1118
        %1131 = vrot.lane.b32.xlu0 %v1123, 32
        %v1132 = vpop.permute.xlu0 %1131
        %1133 = vrot.lane.b32.xlu0 %v1124, 32
        %v1134 = vpop.permute.xlu0 %1133
        %1135 = vrot.lane.b32.xlu0 %v1125, 32
        %v1136 = vpop.permute.xlu0 %1135
        %1137 = vrot.lane.b32.xlu0 %v1126, 32
        %v1138 = vpop.permute.xlu0 %1137
        %v1139 = vsel %vm540, %v1132, 0
        %v1141 = vsel %vm540, %v1134, 0
        %v1143 = vsel %vm540, %v1136, 0
        %v1145 = vsel %vm540, %v1138, 0
        %1147 = vmatpush.msra.mxu0 0.0
        %1148 = vmatpush.msra.mxu0 0.0
        %1149 = vmatpush.msra.mxu0 0.0
        %1150 = vmatpush.msra.mxu0 0.0
        %1151 = vmatpush.msra.mxu0 0.0
        %1152 = vmatpush.msra.mxu0 0.0
        %1153 = vmatpush.msra.mxu0 0.0
        %1154 = vmatpush.msra.mxu0 0.0
        %1155 = vmatpush.msra.mxu0 0.0
        %1156 = vmatpush.msra.mxu0 0.0
        %1157 = vmatpush.msra.mxu0 0.0
        %1158 = vmatpush.msra.mxu0 0.0
        %1159 = vmatpush.msra.mxu0 %v291
        %1160 = vmatpush.msra.mxu0 %v290
        %1161 = vmatpush.msra.mxu0 %v289
        %1162 = vmatpush.msra.mxu0 %v288
        %1163 = vmatmul.f32.gmra.mxu0 %v1139
        %v1164 = vpop.f32.mrf.mxu0
        %v1165 = vadd.f32 0.0, %v1164
        %1166 = vmatmul.f32.gmra.mxu0 %v1141
        %v1167 = vpop.f32.mrf.mxu0
        %v1168 = vadd.f32 0.0, %v1167
        %1169 = vmatmul.f32.gmra.mxu0 %v1143
        %v1170 = vpop.f32.mrf.mxu0
        %v1171 = vadd.f32 0.0, %v1170
        %1172 = vmatmul.f32.gmra.mxu0 %v1145
        %v1173 = vpop.f32.mrf.mxu0
        %v1174 = vadd.f32 0.0, %v1173
        %1175 = vdwg.mxu0
        %v1176 = vadd.f32 %v481, %v1165
        %v1177 = vadd.f32 %v484, %v1168
        %v1178 = vadd.f32 %v487, %v1171
        %v1179 = vadd.f32 %v490, %v1174
        %v1180 = vxor.u32 %v1176, 2147483648
        %v1181 = vxor.u32 %v1177, 2147483648
        %v1182 = vxor.u32 %v1178, 2147483648
        %v1183 = vxor.u32 %v1179, 2147483648
        %v1184 = vmul.f32 %v1180, 1.442695
        %v1185 = vpow.pop %v1184
        %v1186 = vmul.f32 %v1181, 1.442695
        %v1187 = vpow.pop %v1186
        %v1188 = vmul.f32 %v1182, 1.442695
        %v1189 = vpow.pop %v1188
        %v1190 = vmul.f32 %v1183, 1.442695
        %v1191 = vpow.pop %v1190
        %v1192 = vadd.f32 %v1185, 1.0
        %v1193 = vadd.f32 %v1187, 1.0
        %v1194 = vadd.f32 %v1189, 1.0
        %v1195 = vadd.f32 %v1191, 1.0
        %v1196 = vrcp.pop %v1192
        %v1197 = vmul.f32 %v1192, %v1196
        %v1198 = vsub.f32 1.0, %v1197
        %v1199 = vmul.f32 %v1196, %v1198
        %v1200 = vadd.f32 %v1196, %v1199
        %vm1201 = vweird.f32 %v1192
        %vm1202 = vweird.f32 %v1196
        %vm1203 = vmor %vm1201, %vm1202
        %v1204 = vsel %vm1203, %v1196, %v1200
        %v1205 = vand.u32 2147483647, %v1192
        %vm1206 = vcmp.eq.f32.partialorder %v1205, 8.507059e+37
        %v1207 = vand.u32 %v1192, 2147483648
        %v1208 = vor.u32 1.1754944e-38, %v1207
        %v1209 = vsel %vm1206, %v1208, %v1204
        %v1210 = vmul.f32 1.0, %v1209
        %v1211 = vrcp.pop %v1193
        %v1212 = vmul.f32 %v1193, %v1211
        %v1213 = vsub.f32 1.0, %v1212
        %v1214 = vmul.f32 %v1211, %v1213
        %v1215 = vadd.f32 %v1211, %v1214
        %vm1216 = vweird.f32 %v1193
        %vm1217 = vweird.f32 %v1211
        %vm1218 = vmor %vm1216, %vm1217
        %v1219 = vsel %vm1218, %v1211, %v1215
        %v1220 = vand.u32 2147483647, %v1193
        %vm1221 = vcmp.eq.f32.partialorder %v1220, 8.507059e+37
        %v1222 = vand.u32 %v1193, 2147483648
        %v1223 = vor.u32 1.1754944e-38, %v1222
        %v1224 = vsel %vm1221, %v1223, %v1219
        %v1225 = vmul.f32 1.0, %v1224
        %v1226 = vrcp.pop %v1194
        %v1227 = vmul.f32 %v1194, %v1226
        %v1228 = vsub.f32 1.0, %v1227
        %v1229 = vmul.f32 %v1226, %v1228
        %v1230 = vadd.f32 %v1226, %v1229
        %vm1231 = vweird.f32 %v1194
        %vm1232 = vweird.f32 %v1226
        %vm1233 = vmor %vm1231, %vm1232
        %v1234 = vsel %vm1233, %v1226, %v1230
        %v1235 = vand.u32 2147483647, %v1194
        %vm1236 = vcmp.eq.f32.partialorder %v1235, 8.507059e+37
        %v1237 = vand.u32 %v1194, 2147483648
        %v1238 = vor.u32 1.1754944e-38, %v1237
        %v1239 = vsel %vm1236, %v1238, %v1234
        %v1240 = vmul.f32 1.0, %v1239
        %v1241 = vrcp.pop %v1195
        %v1242 = vmul.f32 %v1195, %v1241
        %v1243 = vsub.f32 1.0, %v1242
        %v1244 = vmul.f32 %v1241, %v1243
        %v1245 = vadd.f32 %v1241, %v1244
        %vm1246 = vweird.f32 %v1195
        %vm1247 = vweird.f32 %v1241
        %vm1248 = vmor %vm1246, %vm1247
        %v1249 = vsel %vm1248, %v1241, %v1245
        %v1250 = vand.u32 2147483647, %v1195
        %vm1251 = vcmp.eq.f32.partialorder %v1250, 8.507059e+37
        %v1252 = vand.u32 %v1195, 2147483648
        %v1253 = vor.u32 1.1754944e-38, %v1252
        %v1254 = vsel %vm1251, %v1253, %v1249
        %v1255 = vmul.f32 1.0, %v1254
        %v1256 = vtanh.pop %v1176
        %v1257 = vtanh.pop %v1177
        %v1258 = vtanh.pop %v1178
        %v1259 = vtanh.pop %v1179
        %v1260 = vmul.f32 %v1210, %v1099
        %v1261 = vmul.f32 %v1225, %v1100
        %v1262 = vmul.f32 %v1240, %v1101
        %v1263 = vmul.f32 %v1255, %v1102
        %1268 = vrot.lane.b32.xlu0 %v1256, 64
        %v1269 = vpop.permute.xlu0 %1268
        %1270 = vrot.lane.b32.xlu0 %v1257, 64
        %v1271 = vpop.permute.xlu0 %1270
        %1272 = vrot.lane.b32.xlu0 %v1258, 64
        %v1273 = vpop.permute.xlu0 %1272
        %1274 = vrot.lane.b32.xlu0 %v1259, 64
        %v1275 = vpop.permute.xlu0 %1274
        %v1280 = vmul.f32 %v1210, %v1269
        %v1281 = vmul.f32 %v1225, %v1271
        %v1282 = vmul.f32 %v1240, %v1273
        %v1283 = vmul.f32 %v1255, %v1275
        %1288 = vrot.lane.b32.xlu0 %v1280, 32
        %v1289 = vpop.permute.xlu0 %1288
        %1290 = vrot.lane.b32.xlu0 %v1281, 32
        %v1291 = vpop.permute.xlu0 %1290
        %1292 = vrot.lane.b32.xlu0 %v1282, 32
        %v1293 = vpop.permute.xlu0 %1292
        %1294 = vrot.lane.b32.xlu0 %v1283, 32
        %v1295 = vpop.permute.xlu0 %1294
        %v1300 = vadd.f32 %v1260, %v1289
        %v1301 = vadd.f32 %v1261, %v1291
        %v1302 = vadd.f32 %v1262, %v1293
        %v1303 = vadd.f32 %v1263, %v1295
        %v1304 = vtanh.pop %v1300
        %v1305 = vtanh.pop %v1301
        %v1306 = vtanh.pop %v1302
        %v1307 = vtanh.pop %v1303
        %1312 = vrot.lane.b32.xlu0 %v1304, 64
        %v1313 = vpop.permute.xlu0 %1312
        %1314 = vrot.lane.b32.xlu0 %v1305, 64
        %v1315 = vpop.permute.xlu0 %1314
        %1316 = vrot.lane.b32.xlu0 %v1306, 64
        %v1317 = vpop.permute.xlu0 %1316
        %1318 = vrot.lane.b32.xlu0 %v1307, 64
        %v1319 = vpop.permute.xlu0 %1318
        %v1324 = vmul.f32 %v1210, %v1313
        %v1325 = vmul.f32 %v1225, %v1315
        %v1326 = vmul.f32 %v1240, %v1317
        %v1327 = vmul.f32 %v1255, %v1319
        %1332 = vrot.lane.b32.xlu0 %v1324, 32
        %v1333 = vpop.permute.xlu0 %1332
        %1334 = vrot.lane.b32.xlu0 %v1325, 32
        %v1335 = vpop.permute.xlu0 %1334
        %1336 = vrot.lane.b32.xlu0 %v1326, 32
        %v1337 = vpop.permute.xlu0 %1336
        %1338 = vrot.lane.b32.xlu0 %v1327, 32
        %v1339 = vpop.permute.xlu0 %1338
        %v1340 = vsel %vm540, %v1333, 0
        %v1342 = vsel %vm540, %v1335, 0
        %v1344 = vsel %vm540, %v1337, 0
        %v1346 = vsel %vm540, %v1339, 0
        %1348 = vmatpush.msra.mxu0 0.0
        %1349 = vmatpush.msra.mxu0 0.0
        %1350 = vmatpush.msra.mxu0 0.0
        %1351 = vmatpush.msra.mxu0 0.0
        %1352 = vmatpush.msra.mxu0 0.0
        %1353 = vmatpush.msra.mxu0 0.0
        %1354 = vmatpush.msra.mxu0 0.0
        %1355 = vmatpush.msra.mxu0 0.0
        %1356 = vmatpush.msra.mxu0 0.0
        %1357 = vmatpush.msra.mxu0 0.0
        %1358 = vmatpush.msra.mxu0 0.0
        %1359 = vmatpush.msra.mxu0 0.0
        %1360 = vmatpush.msra.mxu0 %v291
        %1361 = vmatpush.msra.mxu0 %v290
        %1362 = vmatpush.msra.mxu0 %v289
        %1363 = vmatpush.msra.mxu0 %v288
        %1364 = vmatmul.f32.gmra.mxu0 %v1340
        %v1365 = vpop.f32.mrf.mxu0
        %v1366 = vadd.f32 0.0, %v1365
        %1367 = vmatmul.f32.gmra.mxu0 %v1342
        %v1368 = vpop.f32.mrf.mxu0
        %v1369 = vadd.f32 0.0, %v1368
        %1370 = vmatmul.f32.gmra.mxu0 %v1344
        %v1371 = vpop.f32.mrf.mxu0
        %v1372 = vadd.f32 0.0, %v1371
        %1373 = vmatmul.f32.gmra.mxu0 %v1346
        %v1374 = vpop.f32.mrf.mxu0
        %v1375 = vadd.f32 0.0, %v1374
        %1376 = vdwg.mxu0
        %v1377 = vadd.f32 %v493, %v1366
        %v1378 = vadd.f32 %v496, %v1369
        %v1379 = vadd.f32 %v499, %v1372
        %v1380 = vadd.f32 %v502, %v1375
        %v1381 = vxor.u32 %v1377, 2147483648
        %v1382 = vxor.u32 %v1378, 2147483648
        %v1383 = vxor.u32 %v1379, 2147483648
        %v1384 = vxor.u32 %v1380, 2147483648
        %v1385 = vmul.f32 %v1381, 1.442695
        %v1386 = vpow.pop %v1385
        %v1387 = vmul.f32 %v1382, 1.442695
        %v1388 = vpow.pop %v1387
        %v1389 = vmul.f32 %v1383, 1.442695
        %v1390 = vpow.pop %v1389
        %v1391 = vmul.f32 %v1384, 1.442695
        %v1392 = vpow.pop %v1391
        %v1393 = vadd.f32 %v1386, 1.0
        %v1394 = vadd.f32 %v1388, 1.0
        %v1395 = vadd.f32 %v1390, 1.0
        %v1396 = vadd.f32 %v1392, 1.0
        %v1397 = vrcp.pop %v1393
        %v1398 = vmul.f32 %v1393, %v1397
        %v1399 = vsub.f32 1.0, %v1398
        %v1400 = vmul.f32 %v1397, %v1399
        %v1401 = vadd.f32 %v1397, %v1400
        %vm1402 = vweird.f32 %v1393
        %vm1403 = vweird.f32 %v1397
        %vm1404 = vmor %vm1402, %vm1403
        %v1405 = vsel %vm1404, %v1397, %v1401
        %v1406 = vand.u32 2147483647, %v1393
        %vm1407 = vcmp.eq.f32.partialorder %v1406, 8.507059e+37
        %v1408 = vand.u32 %v1393, 2147483648
        %v1409 = vor.u32 1.1754944e-38, %v1408
        %v1410 = vsel %vm1407, %v1409, %v1405
        %v1411 = vmul.f32 1.0, %v1410
        %v1412 = vrcp.pop %v1394
        %v1413 = vmul.f32 %v1394, %v1412
        %v1414 = vsub.f32 1.0, %v1413
        %v1415 = vmul.f32 %v1412, %v1414
        %v1416 = vadd.f32 %v1412, %v1415
        %vm1417 = vweird.f32 %v1394
        %vm1418 = vweird.f32 %v1412
        %vm1419 = vmor %vm1417, %vm1418
        %v1420 = vsel %vm1419, %v1412, %v1416
        %v1421 = vand.u32 2147483647, %v1394
        %vm1422 = vcmp.eq.f32.partialorder %v1421, 8.507059e+37
        %v1423 = vand.u32 %v1394, 2147483648
        %v1424 = vor.u32 1.1754944e-38, %v1423
        %v1425 = vsel %vm1422, %v1424, %v1420
        %v1426 = vmul.f32 1.0, %v1425
        %v1427 = vrcp.pop %v1395
        %v1428 = vmul.f32 %v1395, %v1427
        %v1429 = vsub.f32 1.0, %v1428
        %v1430 = vmul.f32 %v1427, %v1429
        %v1431 = vadd.f32 %v1427, %v1430
        %vm1432 = vweird.f32 %v1395
        %vm1433 = vweird.f32 %v1427
        %vm1434 = vmor %vm1432, %vm1433
        %v1435 = vsel %vm1434, %v1427, %v1431
        %v1436 = vand.u32 2147483647, %v1395
        %vm1437 = vcmp.eq.f32.partialorder %v1436, 8.507059e+37
        %v1438 = vand.u32 %v1395, 2147483648
        %v1439 = vor.u32 1.1754944e-38, %v1438
        %v1440 = vsel %vm1437, %v1439, %v1435
        %v1441 = vmul.f32 1.0, %v1440
        %v1442 = vrcp.pop %v1396
        %v1443 = vmul.f32 %v1396, %v1442
        %v1444 = vsub.f32 1.0, %v1443
        %v1445 = vmul.f32 %v1442, %v1444
        %v1446 = vadd.f32 %v1442, %v1445
        %vm1447 = vweird.f32 %v1396
        %vm1448 = vweird.f32 %v1442
        %vm1449 = vmor %vm1447, %vm1448
        %v1450 = vsel %vm1449, %v1442, %v1446
        %v1451 = vand.u32 2147483647, %v1396
        %vm1452 = vcmp.eq.f32.partialorder %v1451, 8.507059e+37
        %v1453 = vand.u32 %v1396, 2147483648
        %v1454 = vor.u32 1.1754944e-38, %v1453
        %v1455 = vsel %vm1452, %v1454, %v1450
        %v1456 = vmul.f32 1.0, %v1455
        %v1457 = vtanh.pop %v1377
        %v1458 = vtanh.pop %v1378
        %v1459 = vtanh.pop %v1379
        %v1460 = vtanh.pop %v1380
        %v1461 = vmul.f32 %v1411, %v1300
        %v1462 = vmul.f32 %v1426, %v1301
        %v1463 = vmul.f32 %v1441, %v1302
        %v1464 = vmul.f32 %v1456, %v1303
        %1469 = vrot.lane.b32.xlu0 %v1457, 64
        %v1470 = vpop.permute.xlu0 %1469
        %1471 = vrot.lane.b32.xlu0 %v1458, 64
        %v1472 = vpop.permute.xlu0 %1471
        %1473 = vrot.lane.b32.xlu0 %v1459, 64
        %v1474 = vpop.permute.xlu0 %1473
        %1475 = vrot.lane.b32.xlu0 %v1460, 64
        %v1476 = vpop.permute.xlu0 %1475
        %v1481 = vmul.f32 %v1411, %v1470
        %v1482 = vmul.f32 %v1426, %v1472
        %v1483 = vmul.f32 %v1441, %v1474
        %v1484 = vmul.f32 %v1456, %v1476
        %1489 = vrot.lane.b32.xlu0 %v1481, 32
        %v1490 = vpop.permute.xlu0 %1489
        %1491 = vrot.lane.b32.xlu0 %v1482, 32
        %v1492 = vpop.permute.xlu0 %1491
        %1493 = vrot.lane.b32.xlu0 %v1483, 32
        %v1494 = vpop.permute.xlu0 %1493
        %1495 = vrot.lane.b32.xlu0 %v1484, 32
        %v1496 = vpop.permute.xlu0 %1495
        %v1501 = vadd.f32 %v1461, %v1490
        %v1502 = vadd.f32 %v1462, %v1492
        %v1503 = vadd.f32 %v1463, %v1494
        %v1504 = vadd.f32 %v1464, %v1496
        %v1505 = vtanh.pop %v1501
        %v1506 = vtanh.pop %v1502
        %v1507 = vtanh.pop %v1503
        %v1508 = vtanh.pop %v1504
        %1513 = vrot.lane.b32.xlu0 %v1505, 64
        %v1514 = vpop.permute.xlu0 %1513
        %1515 = vrot.lane.b32.xlu0 %v1506, 64
        %v1516 = vpop.permute.xlu0 %1515
        %1517 = vrot.lane.b32.xlu0 %v1507, 64
        %v1518 = vpop.permute.xlu0 %1517
        %1519 = vrot.lane.b32.xlu0 %v1508, 64
        %v1520 = vpop.permute.xlu0 %1519
        %v1525 = vmul.f32 %v1411, %v1514
        %v1526 = vmul.f32 %v1426, %v1516
        %v1527 = vmul.f32 %v1441, %v1518
        %v1528 = vmul.f32 %v1456, %v1520
        %1533 = vrot.lane.b32.xlu0 %v1525, 32
        %v1534 = vpop.permute.xlu0 %1533
        %1535 = vrot.lane.b32.xlu0 %v1526, 32
        %v1536 = vpop.permute.xlu0 %1535
        %1537 = vrot.lane.b32.xlu0 %v1527, 32
        %v1538 = vpop.permute.xlu0 %1537
        %1539 = vrot.lane.b32.xlu0 %v1528, 32
        %v1540 = vpop.permute.xlu0 %1539
        %v1541 = vsel %vm540, %v1534, 0
        %v1543 = vsel %vm540, %v1536, 0
        %v1545 = vsel %vm540, %v1538, 0
        %v1547 = vsel %vm540, %v1540, 0
        %1549 = vmatpush.msra.mxu0 0.0
        %1550 = vmatpush.msra.mxu0 0.0
        %1551 = vmatpush.msra.mxu0 0.0
        %1552 = vmatpush.msra.mxu0 0.0
        %1553 = vmatpush.msra.mxu0 0.0
        %1554 = vmatpush.msra.mxu0 0.0
        %1555 = vmatpush.msra.mxu0 0.0
        %1556 = vmatpush.msra.mxu0 0.0
        %1557 = vmatpush.msra.mxu0 0.0
        %1558 = vmatpush.msra.mxu0 0.0
        %1559 = vmatpush.msra.mxu0 0.0
        %1560 = vmatpush.msra.mxu0 0.0
        %1561 = vmatpush.msra.mxu0 %v291
        %1562 = vmatpush.msra.mxu0 %v290
        %1563 = vmatpush.msra.mxu0 %v289
        %1564 = vmatpush.msra.mxu0 %v288
        %1565 = vmatmul.f32.gmra.mxu0 %v1541
        %v1566 = vpop.f32.mrf.mxu0
        %v1567 = vadd.f32 0.0, %v1566
        %1568 = vmatmul.f32.gmra.mxu0 %v1543
        %v1569 = vpop.f32.mrf.mxu0
        %v1570 = vadd.f32 0.0, %v1569
        %1571 = vmatmul.f32.gmra.mxu0 %v1545
        %v1572 = vpop.f32.mrf.mxu0
        %v1573 = vadd.f32 0.0, %v1572
        %1574 = vmatmul.f32.gmra.mxu0 %v1547
        %v1575 = vpop.f32.mrf.mxu0
        %v1576 = vadd.f32 0.0, %v1575
        %1577 = vdwg.mxu0
        %v1578 = vadd.f32 %v505, %v1567
        %v1579 = vadd.f32 %v508, %v1570
        %v1580 = vadd.f32 %v511, %v1573
        %v1581 = vadd.f32 %v514, %v1576
        %v1582 = vxor.u32 %v1578, 2147483648
        %v1583 = vxor.u32 %v1579, 2147483648
        %v1584 = vxor.u32 %v1580, 2147483648
        %v1585 = vxor.u32 %v1581, 2147483648
        %v1586 = vmul.f32 %v1582, 1.442695
        %v1587 = vpow.pop %v1586
        %v1588 = vmul.f32 %v1583, 1.442695
        %v1589 = vpow.pop %v1588
        %v1590 = vmul.f32 %v1584, 1.442695
        %v1591 = vpow.pop %v1590
        %v1592 = vmul.f32 %v1585, 1.442695
        %v1593 = vpow.pop %v1592
        %v1594 = vadd.f32 %v1587, 1.0
        %v1595 = vadd.f32 %v1589, 1.0
        %v1596 = vadd.f32 %v1591, 1.0
        %v1597 = vadd.f32 %v1593, 1.0
        %v1598 = vrcp.pop %v1594
        %v1599 = vmul.f32 %v1594, %v1598
        %v1600 = vsub.f32 1.0, %v1599
        %v1601 = vmul.f32 %v1598, %v1600
        %v1602 = vadd.f32 %v1598, %v1601
        %vm1603 = vweird.f32 %v1594
        %vm1604 = vweird.f32 %v1598
        %vm1605 = vmor %vm1603, %vm1604
        %v1606 = vsel %vm1605, %v1598, %v1602
        %v1607 = vand.u32 2147483647, %v1594
        %vm1608 = vcmp.eq.f32.partialorder %v1607, 8.507059e+37
        %v1609 = vand.u32 %v1594, 2147483648
        %v1610 = vor.u32 1.1754944e-38, %v1609
        %v1611 = vsel %vm1608, %v1610, %v1606
        %v1612 = vmul.f32 1.0, %v1611
        %v1613 = vrcp.pop %v1595
        %v1614 = vmul.f32 %v1595, %v1613
        %v1615 = vsub.f32 1.0, %v1614
        %v1616 = vmul.f32 %v1613, %v1615
        %v1617 = vadd.f32 %v1613, %v1616
        %vm1618 = vweird.f32 %v1595
        %vm1619 = vweird.f32 %v1613
        %vm1620 = vmor %vm1618, %vm1619
        %v1621 = vsel %vm1620, %v1613, %v1617
        %v1622 = vand.u32 2147483647, %v1595
        %vm1623 = vcmp.eq.f32.partialorder %v1622, 8.507059e+37
        %v1624 = vand.u32 %v1595, 2147483648
        %v1625 = vor.u32 1.1754944e-38, %v1624
        %v1626 = vsel %vm1623, %v1625, %v1621
        %v1627 = vmul.f32 1.0, %v1626
        %v1628 = vrcp.pop %v1596
        %v1629 = vmul.f32 %v1596, %v1628
        %v1630 = vsub.f32 1.0, %v1629
        %v1631 = vmul.f32 %v1628, %v1630
        %v1632 = vadd.f32 %v1628, %v1631
        %vm1633 = vweird.f32 %v1596
        %vm1634 = vweird.f32 %v1628
        %vm1635 = vmor %vm1633, %vm1634
        %v1636 = vsel %vm1635, %v1628, %v1632
        %v1637 = vand.u32 2147483647, %v1596
        %vm1638 = vcmp.eq.f32.partialorder %v1637, 8.507059e+37
        %v1639 = vand.u32 %v1596, 2147483648
        %v1640 = vor.u32 1.1754944e-38, %v1639
        %v1641 = vsel %vm1638, %v1640, %v1636
        %v1642 = vmul.f32 1.0, %v1641
        %v1643 = vrcp.pop %v1597
        %v1644 = vmul.f32 %v1597, %v1643
        %v1645 = vsub.f32 1.0, %v1644
        %v1646 = vmul.f32 %v1643, %v1645
        %v1647 = vadd.f32 %v1643, %v1646
        %vm1648 = vweird.f32 %v1597
        %vm1649 = vweird.f32 %v1643
        %vm1650 = vmor %vm1648, %vm1649
        %v1651 = vsel %vm1650, %v1643, %v1647
        %v1652 = vand.u32 2147483647, %v1597
        %vm1653 = vcmp.eq.f32.partialorder %v1652, 8.507059e+37
        %v1654 = vand.u32 %v1597, 2147483648
        %v1655 = vor.u32 1.1754944e-38, %v1654
        %v1656 = vsel %vm1653, %v1655, %v1651
        %v1657 = vmul.f32 1.0, %v1656
        %v1658 = vtanh.pop %v1578
        %v1659 = vtanh.pop %v1579
        %v1660 = vtanh.pop %v1580
        %v1661 = vtanh.pop %v1581
        %v1662 = vmul.f32 %v1612, %v1501
        %v1663 = vmul.f32 %v1627, %v1502
        %v1664 = vmul.f32 %v1642, %v1503
        %v1665 = vmul.f32 %v1657, %v1504
        %1670 = vrot.lane.b32.xlu0 %v1658, 64
        %v1671 = vpop.permute.xlu0 %1670
        %1672 = vrot.lane.b32.xlu0 %v1659, 64
        %v1673 = vpop.permute.xlu0 %1672
        %1674 = vrot.lane.b32.xlu0 %v1660, 64
        %v1675 = vpop.permute.xlu0 %1674
        %1676 = vrot.lane.b32.xlu0 %v1661, 64
        %v1677 = vpop.permute.xlu0 %1676
        %v1682 = vmul.f32 %v1612, %v1671
        %v1683 = vmul.f32 %v1627, %v1673
        %v1684 = vmul.f32 %v1642, %v1675
        %v1685 = vmul.f32 %v1657, %v1677
        %1690 = vrot.lane.b32.xlu0 %v1682, 32
        %v1691 = vpop.permute.xlu0 %1690
        %1692 = vrot.lane.b32.xlu0 %v1683, 32
        %v1693 = vpop.permute.xlu0 %1692
        %1694 = vrot.lane.b32.xlu0 %v1684, 32
        %v1695 = vpop.permute.xlu0 %1694
        %1696 = vrot.lane.b32.xlu0 %v1685, 32
        %v1697 = vpop.permute.xlu0 %1696
        %v1702 = vadd.f32 %v1662, %v1691
        %v1703 = vadd.f32 %v1663, %v1693
        %v1704 = vadd.f32 %v1664, %v1695
        %v1705 = vadd.f32 %v1665, %v1697
        %v1706 = vtanh.pop %v1702
        %v1707 = vtanh.pop %v1703
        %v1708 = vtanh.pop %v1704
        %v1709 = vtanh.pop %v1705
        %1714 = vrot.lane.b32.xlu0 %v1706, 64
        %v1715 = vpop.permute.xlu0 %1714
        %1716 = vrot.lane.b32.xlu0 %v1707, 64
        %v1717 = vpop.permute.xlu0 %1716
        %1718 = vrot.lane.b32.xlu0 %v1708, 64
        %v1719 = vpop.permute.xlu0 %1718
        %1720 = vrot.lane.b32.xlu0 %v1709, 64
        %v1721 = vpop.permute.xlu0 %1720
        %v1726 = vmul.f32 %v1612, %v1715
        %v1727 = vmul.f32 %v1627, %v1717
        %v1728 = vmul.f32 %v1642, %v1719
        %v1729 = vmul.f32 %v1657, %v1721
        %1734 = vrot.lane.b32.xlu0 %v1726, 32
        %v1735 = vpop.permute.xlu0 %1734
        %1736 = vrot.lane.b32.xlu0 %v1727, 32
        %v1737 = vpop.permute.xlu0 %1736
        %1738 = vrot.lane.b32.xlu0 %v1728, 32
        %v1739 = vpop.permute.xlu0 %1738
        %1740 = vrot.lane.b32.xlu0 %v1729, 32
        %v1741 = vpop.permute.xlu0 %1740
        %v1742 = vsel %vm540, %v1735, 0
        %v1744 = vsel %vm540, %v1737, 0
        %v1746 = vsel %vm540, %v1739, 0
        %v1748 = vsel %vm540, %v1741, 0
        %1750 = vmatpush.msra.mxu0 0.0
        %1751 = vmatpush.msra.mxu0 0.0
        %1752 = vmatpush.msra.mxu0 0.0
        %1753 = vmatpush.msra.mxu0 0.0
        %1754 = vmatpush.msra.mxu0 0.0
        %1755 = vmatpush.msra.mxu0 0.0
        %1756 = vmatpush.msra.mxu0 0.0
        %1757 = vmatpush.msra.mxu0 0.0
        %1758 = vmatpush.msra.mxu0 0.0
        %1759 = vmatpush.msra.mxu0 0.0
        %1760 = vmatpush.msra.mxu0 0.0
        %1761 = vmatpush.msra.mxu0 0.0
        %1762 = vmatpush.msra.mxu0 %v291
        %1763 = vmatpush.msra.mxu0 %v290
        %1764 = vmatpush.msra.mxu0 %v289
        %1765 = vmatpush.msra.mxu0 %v288
        %1766 = vmatmul.f32.gmra.mxu0 %v1742
        %v1767 = vpop.f32.mrf.mxu0
        %v1768 = vadd.f32 0.0, %v1767
        %1769 = vmatmul.f32.gmra.mxu0 %v1744
        %v1770 = vpop.f32.mrf.mxu0
        %v1771 = vadd.f32 0.0, %v1770
        %1772 = vmatmul.f32.gmra.mxu0 %v1746
        %v1773 = vpop.f32.mrf.mxu0
        %v1774 = vadd.f32 0.0, %v1773
        %1775 = vmatmul.f32.gmra.mxu0 %v1748
        %v1776 = vpop.f32.mrf.mxu0
        %v1777 = vadd.f32 0.0, %v1776
        %1778 = vdwg.mxu0
        %v1779 = vadd.f32 %v517, %v1768
        %v1780 = vadd.f32 %v520, %v1771
        %v1781 = vadd.f32 %v523, %v1774
        %v1782 = vadd.f32 %v526, %v1777
        %v1783 = vxor.u32 %v1779, 2147483648
        %v1784 = vxor.u32 %v1780, 2147483648
        %v1785 = vxor.u32 %v1781, 2147483648
        %v1786 = vxor.u32 %v1782, 2147483648
        %v1787 = vmul.f32 %v1783, 1.442695
        %v1788 = vpow.pop %v1787
        %v1789 = vmul.f32 %v1784, 1.442695
        %v1790 = vpow.pop %v1789
        %v1791 = vmul.f32 %v1785, 1.442695
        %v1792 = vpow.pop %v1791
        %v1793 = vmul.f32 %v1786, 1.442695
        %v1794 = vpow.pop %v1793
        %v1795 = vadd.f32 %v1788, 1.0
        %v1796 = vadd.f32 %v1790, 1.0
        %v1797 = vadd.f32 %v1792, 1.0
        %v1798 = vadd.f32 %v1794, 1.0
        %v1799 = vrcp.pop %v1795
        %v1800 = vmul.f32 %v1795, %v1799
        %v1801 = vsub.f32 1.0, %v1800
        %v1802 = vmul.f32 %v1799, %v1801
        %v1803 = vadd.f32 %v1799, %v1802
        %vm1804 = vweird.f32 %v1795
        %vm1805 = vweird.f32 %v1799
        %vm1806 = vmor %vm1804, %vm1805
        %v1807 = vsel %vm1806, %v1799, %v1803
        %v1808 = vand.u32 2147483647, %v1795
        %vm1809 = vcmp.eq.f32.partialorder %v1808, 8.507059e+37
        %v1810 = vand.u32 %v1795, 2147483648
        %v1811 = vor.u32 1.1754944e-38, %v1810
        %v1812 = vsel %vm1809, %v1811, %v1807
        %v1813 = vmul.f32 1.0, %v1812
        %v1814 = vrcp.pop %v1796
        %v1815 = vmul.f32 %v1796, %v1814
        %v1816 = vsub.f32 1.0, %v1815
        %v1817 = vmul.f32 %v1814, %v1816
        %v1818 = vadd.f32 %v1814, %v1817
        %vm1819 = vweird.f32 %v1796
        %vm1820 = vweird.f32 %v1814
        %vm1821 = vmor %vm1819, %vm1820
        %v1822 = vsel %vm1821, %v1814, %v1818
        %v1823 = vand.u32 2147483647, %v1796
        %vm1824 = vcmp.eq.f32.partialorder %v1823, 8.507059e+37
        %v1825 = vand.u32 %v1796, 2147483648
        %v1826 = vor.u32 1.1754944e-38, %v1825
        %v1827 = vsel %vm1824, %v1826, %v1822
        %v1828 = vmul.f32 1.0, %v1827
        %v1829 = vrcp.pop %v1797
        %v1830 = vmul.f32 %v1797, %v1829
        %v1831 = vsub.f32 1.0, %v1830
        %v1832 = vmul.f32 %v1829, %v1831
        %v1833 = vadd.f32 %v1829, %v1832
        %vm1834 = vweird.f32 %v1797
        %vm1835 = vweird.f32 %v1829
        %vm1836 = vmor %vm1834, %vm1835
        %v1837 = vsel %vm1836, %v1829, %v1833
        %v1838 = vand.u32 2147483647, %v1797
        %vm1839 = vcmp.eq.f32.partialorder %v1838, 8.507059e+37
        %v1840 = vand.u32 %v1797, 2147483648
        %v1841 = vor.u32 1.1754944e-38, %v1840
        %v1842 = vsel %vm1839, %v1841, %v1837
        %v1843 = vmul.f32 1.0, %v1842
        %v1844 = vrcp.pop %v1798
        %v1845 = vmul.f32 %v1798, %v1844
        %v1846 = vsub.f32 1.0, %v1845
        %v1847 = vmul.f32 %v1844, %v1846
        %v1848 = vadd.f32 %v1844, %v1847
        %vm1849 = vweird.f32 %v1798
        %vm1850 = vweird.f32 %v1844
        %vm1851 = vmor %vm1849, %vm1850
        %v1852 = vsel %vm1851, %v1844, %v1848
        %v1853 = vand.u32 2147483647, %v1798
        %vm1854 = vcmp.eq.f32.partialorder %v1853, 8.507059e+37
        %v1855 = vand.u32 %v1798, 2147483648
        %v1856 = vor.u32 1.1754944e-38, %v1855
        %v1857 = vsel %vm1854, %v1856, %v1852
        %v1858 = vmul.f32 1.0, %v1857
        %v1859 = vtanh.pop %v1779
        %v1860 = vtanh.pop %v1780
        %v1861 = vtanh.pop %v1781
        %v1862 = vtanh.pop %v1782
        %v1863 = vmul.f32 %v1813, %v1702
        %v1864 = vmul.f32 %v1828, %v1703
        %v1865 = vmul.f32 %v1843, %v1704
        %v1866 = vmul.f32 %v1858, %v1705
        %1871 = vrot.lane.b32.xlu0 %v1859, 64
        %v1872 = vpop.permute.xlu0 %1871
        %1873 = vrot.lane.b32.xlu0 %v1860, 64
        %v1874 = vpop.permute.xlu0 %1873
        %1875 = vrot.lane.b32.xlu0 %v1861, 64
        %v1876 = vpop.permute.xlu0 %1875
        %1877 = vrot.lane.b32.xlu0 %v1862, 64
        %v1878 = vpop.permute.xlu0 %1877
        %v1883 = vmul.f32 %v1813, %v1872
        %v1884 = vmul.f32 %v1828, %v1874
        %v1885 = vmul.f32 %v1843, %v1876
        %v1886 = vmul.f32 %v1858, %v1878
        %1891 = vrot.lane.b32.xlu0 %v1883, 32
        %v1892 = vpop.permute.xlu0 %1891
        %1893 = vrot.lane.b32.xlu0 %v1884, 32
        %v1894 = vpop.permute.xlu0 %1893
        %1895 = vrot.lane.b32.xlu0 %v1885, 32
        %v1896 = vpop.permute.xlu0 %1895
        %1897 = vrot.lane.b32.xlu0 %v1886, 32
        %v1898 = vpop.permute.xlu0 %1897
        %v1903 = vadd.f32 %v1863, %v1892
        %v1904 = vadd.f32 %v1864, %v1894
        %v1905 = vadd.f32 %v1865, %v1896
        %v1906 = vadd.f32 %v1866, %v1898
        %v1907 = vtanh.pop %v1903
        %v1908 = vtanh.pop %v1904
        %v1909 = vtanh.pop %v1905
        %v1910 = vtanh.pop %v1906
        %1915 = vrot.lane.b32.xlu0 %v1907, 64
        %v1916 = vpop.permute.xlu0 %1915
        %1917 = vrot.lane.b32.xlu0 %v1908, 64
        %v1918 = vpop.permute.xlu0 %1917
        %1919 = vrot.lane.b32.xlu0 %v1909, 64
        %v1920 = vpop.permute.xlu0 %1919
        %1921 = vrot.lane.b32.xlu0 %v1910, 64
        %v1922 = vpop.permute.xlu0 %1921
        %v1927 = vmul.f32 %v1813, %v1916
        %v1928 = vmul.f32 %v1828, %v1918
        %v1929 = vmul.f32 %v1843, %v1920
        %v1930 = vmul.f32 %v1858, %v1922
        %1935 = vrot.lane.b32.xlu0 %v1927, 32
        %v1936 = vpop.permute.xlu0 %1935
        %1937 = vrot.lane.b32.xlu0 %v1928, 32
        %v1938 = vpop.permute.xlu0 %1937
        %1939 = vrot.lane.b32.xlu0 %v1929, 32
        %v1940 = vpop.permute.xlu0 %1939
        %1941 = vrot.lane.b32.xlu0 %v1930, 32
        %v1942 = vpop.permute.xlu0 %1941
        %v1943 = vsel %vm540, %v1936, 0
        %v1945 = vsel %vm540, %v1938, 0
        %v1947 = vsel %vm540, %v1940, 0
        %v1949 = vsel %vm540, %v1942, 0
        %1951 = vmatpush.msra.mxu0 0.0
        %1952 = vmatpush.msra.mxu0 0.0
        %1953 = vmatpush.msra.mxu0 0.0
        %1954 = vmatpush.msra.mxu0 0.0
        %1955 = vmatpush.msra.mxu0 0.0
        %1956 = vmatpush.msra.mxu0 0.0
        %1957 = vmatpush.msra.mxu0 0.0
        %1958 = vmatpush.msra.mxu0 0.0
        %1959 = vmatpush.msra.mxu0 0.0
        %1960 = vmatpush.msra.mxu0 0.0
        %1961 = vmatpush.msra.mxu0 0.0
        %1962 = vmatpush.msra.mxu0 0.0
        %1963 = vmatpush.msra.mxu0 %v291
        %1964 = vmatpush.msra.mxu0 %v290
        %1965 = vmatpush.msra.mxu0 %v289
        %1966 = vmatpush.msra.mxu0 %v288
        %1967 = vmatmul.f32.gmra.mxu0 %v1943
        %v1968 = vpop.f32.mrf.mxu0
        %v1969 = vadd.f32 0.0, %v1968
        %1970 = vmatmul.f32.gmra.mxu0 %v1945
        %v1971 = vpop.f32.mrf.mxu0
        %v1972 = vadd.f32 0.0, %v1971
        %1973 = vmatmul.f32.gmra.mxu0 %v1947
        %v1974 = vpop.f32.mrf.mxu0
        %v1975 = vadd.f32 0.0, %v1974
        %1976 = vmatmul.f32.gmra.mxu0 %v1949
        %v1977 = vpop.f32.mrf.mxu0
        %v1978 = vadd.f32 0.0, %v1977
        %1979 = vdwg.mxu0
        %v1980 = vadd.f32 %v529, %v1969
        %v1981 = vadd.f32 %v532, %v1972
        %v1982 = vadd.f32 %v535, %v1975
        %v1983 = vadd.f32 %v538, %v1978
        %v1984 = vxor.u32 %v1980, 2147483648
        %v1985 = vxor.u32 %v1981, 2147483648
        %v1986 = vxor.u32 %v1982, 2147483648
        %v1987 = vxor.u32 %v1983, 2147483648
        %v1988 = vmul.f32 %v1984, 1.442695
        %v1989 = vpow.pop %v1988
        %v1990 = vmul.f32 %v1985, 1.442695
        %v1991 = vpow.pop %v1990
        %v1992 = vmul.f32 %v1986, 1.442695
        %v1993 = vpow.pop %v1992
        %v1994 = vmul.f32 %v1987, 1.442695
        %v1995 = vpow.pop %v1994
        %v1996 = vadd.f32 %v1989, 1.0
        %v1997 = vadd.f32 %v1991, 1.0
        %v1998 = vadd.f32 %v1993, 1.0
        %v1999 = vadd.f32 %v1995, 1.0
        %v2000 = vrcp.pop %v1996
        %v2001 = vmul.f32 %v1996, %v2000
        %v2002 = vsub.f32 1.0, %v2001
        %v2003 = vmul.f32 %v2000, %v2002
        %v2004 = vadd.f32 %v2000, %v2003
        %vm2005 = vweird.f32 %v1996
        %vm2006 = vweird.f32 %v2000
        %vm2007 = vmor %vm2005, %vm2006
        %v2008 = vsel %vm2007, %v2000, %v2004
        %v2009 = vand.u32 2147483647, %v1996
        %vm2010 = vcmp.eq.f32.partialorder %v2009, 8.507059e+37
        %v2011 = vand.u32 %v1996, 2147483648
        %v2012 = vor.u32 1.1754944e-38, %v2011
        %v2013 = vsel %vm2010, %v2012, %v2008
        %v2014 = vmul.f32 1.0, %v2013
        %v2015 = vrcp.pop %v1997
        %v2016 = vmul.f32 %v1997, %v2015
        %v2017 = vsub.f32 1.0, %v2016
        %v2018 = vmul.f32 %v2015, %v2017
        %v2019 = vadd.f32 %v2015, %v2018
        %vm2020 = vweird.f32 %v1997
        %vm2021 = vweird.f32 %v2015
        %vm2022 = vmor %vm2020, %vm2021
        %v2023 = vsel %vm2022, %v2015, %v2019
        %v2024 = vand.u32 2147483647, %v1997
        %vm2025 = vcmp.eq.f32.partialorder %v2024, 8.507059e+37
        %v2026 = vand.u32 %v1997, 2147483648
        %v2027 = vor.u32 1.1754944e-38, %v2026
        %v2028 = vsel %vm2025, %v2027, %v2023
        %v2029 = vmul.f32 1.0, %v2028
        %v2030 = vrcp.pop %v1998
        %v2031 = vmul.f32 %v1998, %v2030
        %v2032 = vsub.f32 1.0, %v2031
        %v2033 = vmul.f32 %v2030, %v2032
        %v2034 = vadd.f32 %v2030, %v2033
        %vm2035 = vweird.f32 %v1998
        %vm2036 = vweird.f32 %v2030
        %vm2037 = vmor %vm2035, %vm2036
        %v2038 = vsel %vm2037, %v2030, %v2034
        %v2039 = vand.u32 2147483647, %v1998
        %vm2040 = vcmp.eq.f32.partialorder %v2039, 8.507059e+37
        %v2041 = vand.u32 %v1998, 2147483648
        %v2042 = vor.u32 1.1754944e-38, %v2041
        %v2043 = vsel %vm2040, %v2042, %v2038
        %v2044 = vmul.f32 1.0, %v2043
        %v2045 = vrcp.pop %v1999
        %v2046 = vmul.f32 %v1999, %v2045
        %v2047 = vsub.f32 1.0, %v2046
        %v2048 = vmul.f32 %v2045, %v2047
        %v2049 = vadd.f32 %v2045, %v2048
        %vm2050 = vweird.f32 %v1999
        %vm2051 = vweird.f32 %v2045
        %vm2052 = vmor %vm2050, %vm2051
        %v2053 = vsel %vm2052, %v2045, %v2049
        %v2054 = vand.u32 2147483647, %v1999
        %vm2055 = vcmp.eq.f32.partialorder %v2054, 8.507059e+37
        %v2056 = vand.u32 %v1999, 2147483648
        %v2057 = vor.u32 1.1754944e-38, %v2056
        %v2058 = vsel %vm2055, %v2057, %v2053
        %v2059 = vmul.f32 1.0, %v2058
        %v2060 = vtanh.pop %v1980
        %v2061 = vtanh.pop %v1981
        %v2062 = vtanh.pop %v1982
        %v2063 = vtanh.pop %v1983
        %v2064 = vmul.f32 %v2014, %v1903
        %v2065 = vmul.f32 %v2029, %v1904
        %v2066 = vmul.f32 %v2044, %v1905
        %v2067 = vmul.f32 %v2059, %v1906
        %2072 = vrot.lane.b32.xlu0 %v2060, 64
        %v2073 = vpop.permute.xlu0 %2072
        %2074 = vrot.lane.b32.xlu0 %v2061, 64
        %v2075 = vpop.permute.xlu0 %2074
        %2076 = vrot.lane.b32.xlu0 %v2062, 64
        %v2077 = vpop.permute.xlu0 %2076
        %2078 = vrot.lane.b32.xlu0 %v2063, 64
        %v2079 = vpop.permute.xlu0 %2078
        %v2084 = vmul.f32 %v2014, %v2073
        %v2085 = vmul.f32 %v2029, %v2075
        %v2086 = vmul.f32 %v2044, %v2077
        %v2087 = vmul.f32 %v2059, %v2079
        %2092 = vrot.lane.b32.xlu0 %v2084, 32
        %v2093 = vpop.permute.xlu0 %2092
        %2094 = vrot.lane.b32.xlu0 %v2085, 32
        %v2095 = vpop.permute.xlu0 %2094
        %2096 = vrot.lane.b32.xlu0 %v2086, 32
        %v2097 = vpop.permute.xlu0 %2096
        %2098 = vrot.lane.b32.xlu0 %v2087, 32
        %v2099 = vpop.permute.xlu0 %2098
        %v2104 = vadd.f32 %v2064, %v2093
        %v2105 = vadd.f32 %v2065, %v2095
        %v2106 = vadd.f32 %v2066, %v2097
        %v2107 = vadd.f32 %v2067, %v2099
        %v2108 = vtanh.pop %v2104
        %v2109 = vtanh.pop %v2105
        %v2110 = vtanh.pop %v2106
        %v2111 = vtanh.pop %v2107
        %2116 = vrot.lane.b32.xlu0 %v2108, 64
        %v2117 = vpop.permute.xlu0 %2116
        %2118 = vrot.lane.b32.xlu0 %v2109, 64
        %v2119 = vpop.permute.xlu0 %2118
        %2120 = vrot.lane.b32.xlu0 %v2110, 64
        %v2121 = vpop.permute.xlu0 %2120
        %2122 = vrot.lane.b32.xlu0 %v2111, 64
        %v2123 = vpop.permute.xlu0 %2122
        %v2128 = vmul.f32 %v2014, %v2117
        %v2129 = vmul.f32 %v2029, %v2119
        %v2130 = vmul.f32 %v2044, %v2121
        %v2131 = vmul.f32 %v2059, %v2123
        %v2132 = vmax.f32 %v2128, %v2129
        %v2133 = vmax.f32 %v2132, %v2130
        %v2134 = vmax.f32 %v2133, %v2131
        %v2135 = vld [vmem:[%s4] sm:$0xff]
        %v2136 = vld [vmem:[%s4 + $0x8] sm:$0xff]
        %v2137 = vld [vmem:[%s4 + $0x10] sm:$0xff]
        %v2138 = vld [vmem:[%s4 + $0x18] sm:$0xff]
        %v2139 = vld [vmem:[%s5] sm:$0x1]
        %v2141 = vperm.slane %v2139, 0
        %2144 = vrot.lane.b32.xlu0 %v2134, 32
        %v2145 = vpop.permute.xlu0 %2144
        %v2146 = vsel %vm540, %v2145, 0
        %2148 = vmatpush.msra.mxu0 0.0
        %2149 = vmatpush.msra.mxu0 0.0
        %2150 = vmatpush.msra.mxu0 0.0
        %2151 = vmatpush.msra.mxu0 0.0
        %2152 = vmatpush.msra.mxu0 0.0
        %2153 = vmatpush.msra.mxu0 0.0
        %2154 = vmatpush.msra.mxu0 0.0
        %2155 = vmatpush.msra.mxu0 0.0
        %2156 = vmatpush.msra.mxu0 0.0
        %2157 = vmatpush.msra.mxu0 0.0
        %2158 = vmatpush.msra.mxu0 0.0
        %2159 = vmatpush.msra.mxu0 0.0
        %2160 = vmatpush.msra.mxu0 %v2138
        %2161 = vmatpush.msra.mxu0 %v2137
        %2162 = vmatpush.msra.mxu0 %v2136
        %2163 = vmatpush.msra.mxu0 %v2135
        %2164 = vmatmul.f32.gmra.mxu0 %v2146
        %v2165 = vpop.f32.mrf.mxu0
        %v2166 = vadd.f32 %v2141, %v2165
        %2167 = vdwg.mxu0
        %v2168 = vxor.u32 %v2166, 2147483648
        %v2169 = vmul.f32 %v2168, 1.442695
        %v2170 = vpow.pop %v2169
        %v2171 = vadd.f32 %v2170, 1.0
        %v2172 = vrcp.pop %v2171
        %v2173 = vmul.f32 %v2171, %v2172
        %v2174 = vsub.f32 1.0, %v2173
        %v2175 = vmul.f32 %v2172, %v2174
        %v2176 = vadd.f32 %v2172, %v2175
        %vm2177 = vweird.f32 %v2171
        %vm2178 = vweird.f32 %v2172
        %vm2179 = vmor %vm2177, %vm2178
        %v2180 = vsel %vm2179, %v2172, %v2176
        %v2181 = vand.u32 2147483647, %v2171
        %vm2182 = vcmp.eq.f32.partialorder %v2181, 8.507059e+37
        %v2183 = vand.u32 %v2171, 2147483648
        %v2184 = vor.u32 1.1754944e-38, %v2183
        %v2185 = vsel %vm2182, %v2184, %v2180
        %v2186 = vmul.f32 1.0, %v2185
        %vm2187 = vcmask 64512
        %2188 = vst.msk [vmem:[%s287] sm:$0xff] %vm2187, %v2186
        %p2189 = scmp.lt.s32.totalorder %s21, 1
        %s2190 = scalar_select %p2189, %s21, 1
        %s2191 = smul.addr %s2190, 8
        %s2192 = scalar_lea.vmem %s6, %s2191
        // Predicated region
        $region53: #{tpu_custom_call.1} parent=43 // pred_check
          %p2193 = pneg %p170
        $region54: #{tpu_custom_call.1} parent=43 // pred_check_branch
          %2195 = sbr.rel (%p2193) target = $region56
        $region55: #{tpu_custom_call.1} parent=43 // pred_region
          _
        $region56: #{tpu_custom_call.1} parent=43 // pred_fallthru
          _
      $region44: #{tpu_custom_call.1} parent=5 // pred_fallthru
        _
      %p2196 = scmp.le.s32.totalorder 2, %s16
      // Predicated region
      $region57: #{tpu_custom_call.1} parent=5 // pred_check
        %p2197 = pneg %p2196
      $region58: #{tpu_custom_call.1} parent=5 // pred_check_branch
        %2199 = sbr.rel (%p2197) target = $region60
      $region59: #{tpu_custom_call.1} parent=5 // pred_region
        %s2200 = ssub.s32 %s16, 2
        // Predicated region
        $region61: #{tpu_custom_call.1} parent=59 // pred_check
          %p2201 = pneg %p176
        $region62: #{tpu_custom_call.1} parent=59 // pred_check_branch
          %2203 = sbr.rel (%p2201) target = $region64
        $region63: #{tpu_custom_call.1} parent=59 // pred_region
          %p2204 = scmp.lt.s32.totalorder %s22, 1
          %s2205 = scalar_select %p2204, %s22, 1
          %s2206 = smul.addr %s2205, 8
          %s2207 = scalar_lea.vmem %s6, %s2206
        $region64: #{tpu_custom_call.1} parent=59 // pred_fallthru
          _
      $region60: #{tpu_custom_call.1} parent=5 // pred_fallthru
        _
    $region6: #{tpu_custom_call.1} parent=1 // loop_footer
      %s20 = sadd.s32 1, %s16
    $region7: #{tpu_custom_call.1} parent=1 // loop_footer_branch
      %15 = sbr.rel target = $region3
    $region8: #{tpu_custom_call.1} parent=1 // loop_exit
      _
    %2208 = vsyncpa [#allocation3], 1
    %s2209 = scalar_lea.sflag [#allocation3], 1
    %2210 = vsyncpa %s2209, 1
    %2211 = vsyncpa [#allocation5], 1

</llo_original>
